<compile_context>
chip_gen: v7x
topology: tpu7x:2x2x1
jax: 0.10.0
libtpu: 0.0.40
codegen_flags: <defaults>
</compile_context>

<pallas_src>
import functools
import math

import jax
import jax.numpy as jnp
import numpy as np
from jax.experimental import pallas as pl
from jax.experimental.pallas import tpu as pltpu


def _lcm(a, b):
    return a * b // math.gcd(a, b)


def _vmem_capacity_bytes():
    """Physical VMEM of the local chip; conservative fallback (v7x = 64 MiB)."""
    try:
        info = pltpu.get_tpu_info()
        cap = getattr(info, "vmem_capacity_bytes", None)
        if cap:
            return int(cap)
    except Exception:
        pass
    return 64 * 1024 * 1024


def temporal_block_kernel(x_ref, w1_ref, b1_ref, w2_ref, b2_ref, o_ref, *, L):
    # x_ref : (tile_m, c)   rows are (n, l) flattened, tile_m is a multiple of L
    # w1_ref: (3, c, 4c)    taps [prev | cur | next], matmul dtype (e.g. bf16)
    # b1_ref: (1, 4c) f32   w2_ref: (4c, c) matmul dtype   b2_ref: (1, c) f32
    # o_ref : (tile_m, c)
    tm, c = x_ref.shape
    mm_dtype = w1_ref.dtype

    x_in = x_ref[...]                                   # input dtype
    x = x_in.astype(mm_dtype)                           # center-tap MXU operand

    # Sequence-local position of every row.  tile_m % L == 0, so a tile never
    # splits a sequence; rolling by +-1 row only leaks across sequence
    # boundaries at l==0 / l==L-1, which the zero-pad mask of the k=3 conv
    # removes again (rolls are XLU work, masks are cheap VPU selects).
    l_idx = jax.lax.broadcasted_iota(jnp.int32, (tm, 1), 0) % L
    x_prev = jnp.where(l_idx == 0, 0,
                       pltpu.roll(x_in, shift=1, axis=0)).astype(mm_dtype)       # x[l-1]
    x_next = jnp.where(l_idx == L - 1, 0,
                       pltpu.roll(x_in, shift=tm - 1, axis=0)).astype(mm_dtype)  # x[l+1]

    # Conv1d(k=3, pad=1) as three accumulating MXU matmuls, f32 accumulation.
    h = jnp.dot(x, w1_ref[1], preferred_element_type=jnp.float32)
    h += jnp.dot(x_prev, w1_ref[0], preferred_element_type=jnp.float32)
    h += jnp.dot(x_next, w1_ref[2], preferred_element_type=jnp.float32)
    h += b1_ref[...].astype(jnp.float32)

    # SiLU in f32 (EUP sigmoid; v5e has no bf16 VPU/EUP path).
    h = h * jax.nn.sigmoid(h)

    # Conv1d(k=1): pointwise matmul, narrow operand for the MXU.
    z = jnp.dot(h.astype(mm_dtype), w2_ref[...], preferred_element_type=jnp.float32)
    z += b2_ref[...].astype(jnp.float32)

    # Residual: re-read the input tile right before the add (short live range).
    o_ref[...] = (x_ref[...].astype(jnp.float32) + z).astype(o_ref.dtype)


def _pick_tile_m(M, L, c, c4, x_bytes, mm_bytes, budget_bytes):
    """Row tile for the flattened (M, c) view.

    Constraints/preferences: multiple of L (roll+mask taps require whole
    sequences per tile) and of 8 (sublane tiling); multiple of 256 (MXU tile)
    when the problem is big enough; grow to fill the VMEM budget; keep >= 4
    grid steps so the megacore split still has DMA/compute overlap per core.
    """
    unit = _lcm(L, 8)
    unit_mxu = _lcm(unit, 256)
    if M // unit_mxu >= 4:
        unit = unit_mxu

    def blk_bytes(tm):
        io = 2 * 2 * tm * c * x_bytes                       # dbl-buffered in + out tiles
        wts = 2 * (4 * c * c4 * mm_bytes + (c4 + c) * 4)    # w1 + w2 (+ biases), worst case 2 bufs
        inter = tm * (3 * c * mm_bytes                      # x / x_prev / x_next operands
                      + c4 * (4 + mm_bytes)                 # f32 h + cast h for 2nd dot
                      + 2 * c * 4)                          # f32 z + residual
        return io + wts + inter

    n_units = pl.cdiv(M, unit)
    k = 1
    while k * 2 <= n_units and blk_bytes((k * 2) * unit) <= budget_bytes:
        k *= 2
    while k > 1 and pl.cdiv(n_units, k) < 4:
        k //= 2
    return k * unit


def temporal_block_pallas(x, w1, b1, w2, b2, *, tile_m=None, matmul_dtype=None):
    """x: (b, L, c, h, w).  w1: (3, c, 4c)  b1: (4c,)  w2: (4c, c)  b2: (c,)."""
    b, L, c, hh, ww = x.shape
    c4 = 4 * c
    N = b * hh * ww
    M = N * L

    # bf16 MXU operands by default (f32 accumulation); pass jnp.float32 to force
    # exact f32 matmuls.
    mm_dtype = jnp.bfloat16 if matmul_dtype is None else matmul_dtype

    x_bytes = jnp.dtype(x.dtype).itemsize
    mm_bytes = jnp.dtype(mm_dtype).itemsize

    vmem_cap = _vmem_capacity_bytes()
    vmem_limit = (vmem_cap // 4) * 3            # 48 MiB on v7x, 96 MiB on v5e/v6e
    if tile_m is None:
        tile_m = _pick_tile_m(M, L, c, c4, x_bytes, mm_bytes,
                              budget_bytes=int(0.35 * vmem_cap))
    grid = (pl.cdiv(M, tile_m),)

    # 'b L c h w -> (b h w L) c' : one transpose, the reshape is free.  No
    # channel/row padding in HBM (block dims equal to full array dims are legal;
    # a <128 output lane width means masked vst, which is the right trade at
    # small c since it saves 10-30x of HBM traffic).
    x2 = jnp.transpose(x, (0, 3, 4, 1, 2)).reshape(M, c)

    w1m = w1.astype(mm_dtype)                    # (3, c, 4c), taps [prev, cur, next]
    w2m = w2.astype(mm_dtype)                    # (4c, c)
    b1f = b1.astype(jnp.float32).reshape(1, c4)  # biases stay f32 (tiny, exact add)
    b2f = b2.astype(jnp.float32).reshape(1, c)

    kernel = functools.partial(temporal_block_kernel, L=L)

    def _call(single_buffer_weights):
        # Weights/biases never change across the grid; single-buffer them to
        # halve their VMEM footprint (matters inside v7x's 64 MiB).
        wkw = {"pipeline_mode": pl.Buffered(1)} if single_buffer_weights else {}
        return pl.pallas_call(
            kernel,
            out_shape=jax.ShapeDtypeStruct((M, c), x.dtype),
            grid_spec=pltpu.PrefetchScalarGridSpec(
                num_scalar_prefetch=0,
                grid=grid,
                in_specs=[
                    pl.BlockSpec((tile_m, c), lambda i: (i, 0)),
                    pl.BlockSpec((3, c, c4), lambda i: (0, 0, 0), **wkw),
                    pl.BlockSpec((1, c4), lambda i: (0, 0), **wkw),
                    pl.BlockSpec((c4, c), lambda i: (0, 0), **wkw),
                    pl.BlockSpec((1, c), lambda i: (0, 0), **wkw),
                ],
                out_specs=pl.BlockSpec((tile_m, c), lambda i: (i, 0)),
            ),
            compiler_params=pltpu.CompilerParams(
                dimension_semantics=("parallel",),
                vmem_limit_bytes=vmem_limit,
            ),
        )(x2, w1m, b1f, w2m, b2f)

    try:
        out2 = _call(True)
    except Exception:
        # pipeline_mode=pl.Buffered(1) unsupported on this jax version; the
        # constant index_map still avoids re-DMA of the weights each step.
        out2 = _call(False)

    # '(b h w L) c -> b L c h w'
    out = out2.reshape(b, hh, ww, L, c)
    return jnp.transpose(out, (0, 3, 4, 1, 2))


def temporal_block_ref(x, w1, b1, w2, b2):
    """Pure-JAX reference (same math, no Pallas)."""
    b, L, c, hh, ww = x.shape
    N = b * hh * ww
    xp = jnp.transpose(x, (0, 3, 4, 1, 2)).reshape(N, L, c)
    zero = jnp.zeros((N, 1, c), xp.dtype)
    x_prev = jnp.concatenate([zero, xp[:, :-1, :]], axis=1)
    x_next = jnp.concatenate([xp[:, 1:, :], zero], axis=1)
    h = (jnp.einsum("nlc,cd->nld", x_prev, w1[0])
         + jnp.einsum("nlc,cd->nld", xp, w1[1])
         + jnp.einsum("nlc,cd->nld", x_next, w1[2])) + b1
    h = h * jax.nn.sigmoid(h)
    z = jnp.einsum("nld,dc->nlc", h, w2) + b2
    out = xp + z
    out = out.reshape(b, hh, ww, L, c)
    return jnp.transpose(out, (0, 3, 4, 1, 2))


if __name__ == "__main__":
    # Small shapes: b=2, L=8, channels=4, h=w=4  ->  x: (2, 8, 4, 4, 4)
    b, L, c, hh, ww = 2, 8, 4, 4, 4
    c4 = 4 * c

    key = jax.random.PRNGKey(0)
    k_x, k_w1, k_b1, k_w2, k_b2 = jax.random.split(key, 5)

    x = jax.random.normal(k_x, (b, L, c, hh, ww), dtype=jnp.float32)

    # PyTorch Conv1d(c, 4c, 3) weight is (4c, c, 3); we store it as (3, c, 4c)
    # i.e. w1[k] = W_pt[:, :, k].T so the kernel can do x @ w1[k].
    w1_pt = 0.1 * jax.random.normal(k_w1, (c4, c, 3), dtype=jnp.float32)
    w1 = jnp.transpose(w1_pt, (2, 1, 0))                 # (3, c, 4c)
    b1 = 0.1 * jax.random.normal(k_b1, (c4,), dtype=jnp.float32)

    # PyTorch Conv1d(4c, c, 1) weight is (c, 4c, 1); we store (4c, c).
    w2_pt = 0.1 * jax.random.normal(k_w2, (c, c4, 1), dtype=jnp.float32)
    w2 = jnp.transpose(w2_pt[:, :, 0], (1, 0))           # (4c, c)
    b2 = 0.1 * jax.random.normal(k_b2, (c,), dtype=jnp.float32)

    ref = jax.block_until_ready(temporal_block_ref(x, w1, b1, w2, b2))

    # Exact-math check: f32 MXU operands.
    out_f32 = jax.block_until_ready(
        temporal_block_pallas(x, w1, b1, w2, b2, matmul_dtype=jnp.float32))
    assert out_f32.shape == x.shape
    np.testing.assert_allclose(np.asarray(out_f32), np.asarray(ref),
                               rtol=1e-5, atol=1e-5)

    # Default fast path: bf16 MXU operands, f32 accumulation.
    out_bf16 = jax.block_until_ready(temporal_block_pallas(x, w1, b1, w2, b2))
    assert out_bf16.shape == x.shape
    np.testing.assert_allclose(np.asarray(out_bf16), np.asarray(ref),
                               rtol=2e-2, atol=2e-2)

    print("KERNEL_OK")
</pallas_src>

<mosaic_0001>
module attributes {stable_mosaic.version = 11 : i64} {
  func.func @temporal_block_kernel(%arg0: i32, %arg1: memref<64x4xf32, #tpu.memory_space<vmem>>, %arg2: memref<3x4x16xf32, #tpu.memory_space<vmem>>, %arg3: memref<1x16xf32, #tpu.memory_space<vmem>>, %arg4: memref<16x4xf32, #tpu.memory_space<vmem>>, %arg5: memref<1x4xf32, #tpu.memory_space<vmem>>, %arg6: memref<64x4xf32, #tpu.memory_space<vmem>>) attributes {dimension_semantics = [#tpu.dimension_semantics<parallel>], iteration_bounds = array<i64: 4>, scalar_prefetch = 0 : i64, scratch_operands = 0 : i64, tpu.core_type = #tpu.core_type<tc>, window_params = [{transform_indices = @transform_0, window_bounds = array<i64: 64, 4>}, {pipeline_mode = #tpu.pipeline_mode<synchronous>, transform_indices = @transform_1, window_bounds = array<i64: 3, 4, 16>}, {pipeline_mode = #tpu.pipeline_mode<synchronous>, transform_indices = @transform_2, window_bounds = array<i64: 1, 16>}, {pipeline_mode = #tpu.pipeline_mode<synchronous>, transform_indices = @transform_3, window_bounds = array<i64: 16, 4>}, {pipeline_mode = #tpu.pipeline_mode<synchronous>, transform_indices = @transform_4, window_bounds = array<i64: 1, 4>}, {transform_indices = @transform_5, window_bounds = array<i64: 64, 4>}]} {
    %c0 = arith.constant 0 : index
    %c0_0 = arith.constant 0 : index
    %0 = vector.load %arg1[%c0, %c0_0] : memref<64x4xf32, #tpu.memory_space<vmem>>, vector<64x4xf32>
    %1 = tpu.iota {dimensions = array<i32: 0>} : vector<64x1xi32>
    %c8_i32 = arith.constant 8 : i32
    %c0_i32 = arith.constant 0 : i32
    %2 = arith.cmpi eq, %c8_i32, %c0_i32 : i32
    %c1_i32 = arith.constant 1 : i32
    %3 = arith.select %2, %c1_i32, %c8_i32 : i32
    %4 = vector.broadcast %3 : i32 to vector<64x1xi32>
    %5 = arith.remsi %1, %4 : vector<64x1xi32>
    %c0_i32_1 = arith.constant 0 : i32
    %6 = vector.broadcast %c0_i32_1 : i32 to vector<64x1xi32>
    %7 = arith.cmpi ne, %5, %6 : vector<64x1xi32>
    %c0_i32_2 = arith.constant 0 : i32
    %8 = vector.broadcast %c0_i32_2 : i32 to vector<64x1xi32>
    %9 = arith.cmpi slt, %5, %8 : vector<64x1xi32>
    %c0_i32_3 = arith.constant 0 : i32
    %10 = arith.cmpi slt, %3, %c0_i32_3 : i32
    %11 = vector.broadcast %10 : i1 to vector<64x1xi1>
    %12 = vector.broadcast %11 : vector<64x1xi1> to vector<64x1xi1>
    %13 = arith.xori %9, %12 : vector<64x1xi1>
    %14 = arith.andi %13, %7 : vector<64x1xi1>
    %15 = vector.broadcast %3 : i32 to vector<64x1xi32>
    %16 = arith.addi %5, %15 : vector<64x1xi32>
    %17 = arith.select %14, %16, %5 : vector<64x1xi1>, vector<64x1xi32>
    %c0_i32_4 = arith.constant 0 : i32
    %18 = vector.broadcast %c0_i32_4 : i32 to vector<64x1xi32>
    %19 = arith.cmpi eq, %17, %18 : vector<64x1xi32>
    %c1_i32_5 = arith.constant 1 : i32
    %20 = tpu.dynamic_rotate %0 by %c1_i32_5 dim 0 : vector<64x4xf32>, i32 -> vector<64x4xf32>
    %c0_i32_6 = arith.constant 0 : i32
    %21 = arith.sitofp %c0_i32_6 : i32 to f32
    %22 = vector.shape_cast %19 : vector<64x1xi1> to vector<64x1xi1>
    %23 = vector.broadcast %22 : vector<64x1xi1> to vector<64x4xi1>
    %24 = vector.broadcast %21 : f32 to vector<64x4xf32>
    %25 = arith.select %23, %24, %20 : vector<64x4xi1>, vector<64x4xf32>
    %c7_i32 = arith.constant 7 : i32
    %26 = vector.broadcast %c7_i32 : i32 to vector<64x1xi32>
    %27 = arith.cmpi eq, %17, %26 : vector<64x1xi32>
    %c63_i32 = arith.constant 63 : i32
    %28 = tpu.dynamic_rotate %0 by %c63_i32 dim 0 : vector<64x4xf32>, i32 -> vector<64x4xf32>
    %c0_i32_7 = arith.constant 0 : i32
    %29 = arith.sitofp %c0_i32_7 : i32 to f32
    %30 = vector.shape_cast %27 : vector<64x1xi1> to vector<64x1xi1>
    %31 = vector.broadcast %30 : vector<64x1xi1> to vector<64x4xi1>
    %32 = vector.broadcast %29 : f32 to vector<64x4xf32>
    %33 = arith.select %31, %32, %28 : vector<64x4xi1>, vector<64x4xf32>
    %c1 = arith.constant 1 : index
    %c0_8 = arith.constant 0 : index
    %c0_9 = arith.constant 0 : index
    %34 = vector.load %arg2[%c1, %c0_8, %c0_9] : memref<3x4x16xf32, #tpu.memory_space<vmem>>, vector<1x4x16xf32>
    %35 = vector.shape_cast %34 : vector<1x4x16xf32> to vector<4x16xf32>
    %cst = arith.constant dense<0.000000e+00> : vector<64x16xf32>
    %36 = tpu.matmul %0, %35, %cst {dimension_numbers = #tpu.dot_dimension_numbers<[1], [0], [0], [1], [0, 0, 1, 1], [], []>} : vector<64x4xf32>, vector<4x16xf32>, vector<64x16xf32> -> vector<64x16xf32>
    %c0_10 = arith.constant 0 : index
    %c0_11 = arith.constant 0 : index
    %c0_12 = arith.constant 0 : index
    %37 = vector.load %arg2[%c0_10, %c0_11, %c0_12] : memref<3x4x16xf32, #tpu.memory_space<vmem>>, vector<1x4x16xf32>
    %38 = vector.shape_cast %37 : vector<1x4x16xf32> to vector<4x16xf32>
    %cst_13 = arith.constant dense<0.000000e+00> : vector<64x16xf32>
    %39 = tpu.matmul %25, %38, %cst_13 {dimension_numbers = #tpu.dot_dimension_numbers<[1], [0], [0], [1], [0, 0, 1, 1], [], []>} : vector<64x4xf32>, vector<4x16xf32>, vector<64x16xf32> -> vector<64x16xf32>
    %40 = arith.addf %36, %39 : vector<64x16xf32>
    %c2 = arith.constant 2 : index
    %c0_14 = arith.constant 0 : index
    %c0_15 = arith.constant 0 : index
    %41 = vector.load %arg2[%c2, %c0_14, %c0_15] : memref<3x4x16xf32, #tpu.memory_space<vmem>>, vector<1x4x16xf32>
    %42 = vector.shape_cast %41 : vector<1x4x16xf32> to vector<4x16xf32>
    %cst_16 = arith.constant dense<0.000000e+00> : vector<64x16xf32>
    %43 = tpu.matmul %33, %42, %cst_16 {dimension_numbers = #tpu.dot_dimension_numbers<[1], [0], [0], [1], [0, 0, 1, 1], [], []>} : vector<64x4xf32>, vector<4x16xf32>, vector<64x16xf32> -> vector<64x16xf32>
    %44 = arith.addf %40, %43 : vector<64x16xf32>
    %c0_17 = arith.constant 0 : index
    %c0_18 = arith.constant 0 : index
    %45 = vector.load %arg3[%c0_17, %c0_18] : memref<1x16xf32, #tpu.memory_space<vmem>>, vector<1x16xf32>
    %46 = vector.broadcast %45 : vector<1x16xf32> to vector<64x16xf32>
    %47 = arith.addf %44, %46 : vector<64x16xf32>
    %48 = arith.negf %47 : vector<64x16xf32>
    %49 = math.exp %48 : vector<64x16xf32>
    %cst_19 = arith.constant 1.000000e+00 : f32
    %50 = vector.broadcast %cst_19 : f32 to vector<64x16xf32>
    %51 = arith.addf %50, %49 : vector<64x16xf32>
    %52 = arith.divf %50, %51 : vector<64x16xf32>
    %53 = arith.mulf %47, %52 : vector<64x16xf32>
    %c0_20 = arith.constant 0 : index
    %c0_21 = arith.constant 0 : index
    %54 = vector.load %arg4[%c0_20, %c0_21] : memref<16x4xf32, #tpu.memory_space<vmem>>, vector<16x4xf32>
    %cst_22 = arith.constant dense<0.000000e+00> : vector<64x4xf32>
    %55 = tpu.matmul %53, %54, %cst_22 {dimension_numbers = #tpu.dot_dimension_numbers<[1], [0], [0], [1], [0, 0, 1, 1], [], []>} : vector<64x16xf32>, vector<16x4xf32>, vector<64x4xf32> -> vector<64x4xf32>
    %c0_23 = arith.constant 0 : index
    %c0_24 = arith.constant 0 : index
    %56 = vector.load %arg5[%c0_23, %c0_24] : memref<1x4xf32, #tpu.memory_space<vmem>>, vector<1x4xf32>
    %57 = vector.broadcast %56 : vector<1x4xf32> to vector<64x4xf32>
    %58 = arith.addf %55, %57 : vector<64x4xf32>
    %c0_25 = arith.constant 0 : index
    %c0_26 = arith.constant 0 : index
    %59 = vector.load %arg1[%c0_25, %c0_26] : memref<64x4xf32, #tpu.memory_space<vmem>>, vector<64x4xf32>
    %60 = arith.addf %59, %58 : vector<64x4xf32>
    %c0_27 = arith.constant 0 : index
    %c0_28 = arith.constant 0 : index
    %61 = vector.load %arg6[%c0_27, %c0_28] : memref<64x4xf32, #tpu.memory_space<vmem>>, vector<64x4xf32>
    tpu.vector_store %arg6[%c0_27, %c0_28], %60 {strides = array<i32>} : memref<64x4xf32, #tpu.memory_space<vmem>>, vector<64x4xf32>,
    return
  }
  func.func @transform_0(%arg0: i32) -> (i32, i32) {
    %c0_i32 = arith.constant 0 : i32
    %c0_i32_0 = arith.constant 0 : i32
    return %arg0, %c0_i32 : i32, i32
  }
  func.func @transform_1(%arg0: i32) -> (i32, i32, i32) {
    %c0_i32 = arith.constant 0 : i32
    %c0_i32_0 = arith.constant 0 : i32
    %c0_i32_1 = arith.constant 0 : i32
    %c0_i32_2 = arith.constant 0 : i32
    return %c0_i32, %c0_i32_0, %c0_i32_1 : i32, i32, i32
  }
  func.func @transform_2(%arg0: i32) -> (i32, i32) {
    %c0_i32 = arith.constant 0 : i32
    %c0_i32_0 = arith.constant 0 : i32
    %c0_i32_1 = arith.constant 0 : i32
    return %c0_i32, %c0_i32_0 : i32, i32
  }
  func.func @transform_3(%arg0: i32) -> (i32, i32) {
    %c0_i32 = arith.constant 0 : i32
    %c0_i32_0 = arith.constant 0 : i32
    %c0_i32_1 = arith.constant 0 : i32
    return %c0_i32, %c0_i32_0 : i32, i32
  }
  func.func @transform_4(%arg0: i32) -> (i32, i32) {
    %c0_i32 = arith.constant 0 : i32
    %c0_i32_0 = arith.constant 0 : i32
    %c0_i32_1 = arith.constant 0 : i32
    return %c0_i32, %c0_i32_0 : i32, i32
  }
  func.func @transform_5(%arg0: i32) -> (i32, i32) {
    %c0_i32 = arith.constant 0 : i32
    %c0_i32_0 = arith.constant 0 : i32
    return %arg0, %c0_i32 : i32, i32
  }
}

module attributes {stable_mosaic.version = 11 : i64} {
  func.func @temporal_block_kernel(%arg0: i32, %arg1: memref<64x4xf32, #tpu.memory_space<vmem>>, %arg2: memref<3x4x16xf32, #tpu.memory_space<vmem>>, %arg3: memref<1x16xf32, #tpu.memory_space<vmem>>, %arg4: memref<16x4xf32, #tpu.memory_space<vmem>>, %arg5: memref<1x4xf32, #tpu.memory_space<vmem>>, %arg6: memref<64x4xf32, #tpu.memory_space<vmem>>) attributes {dimension_semantics = [#tpu.dimension_semantics<parallel>], iteration_bounds = array<i64: 4>, scalar_prefetch = 0 : i64, scratch_operands = 0 : i64, tpu.core_type = #tpu.core_type<tc>, window_params = [{transform_indices = @transform_0, window_bounds = array<i64: 64, 4>}, {pipeline_mode = #tpu.pipeline_mode<synchronous>, transform_indices = @transform_1, window_bounds = array<i64: 3, 4, 16>}, {pipeline_mode = #tpu.pipeline_mode<synchronous>, transform_indices = @transform_2, window_bounds = array<i64: 1, 16>}, {pipeline_mode = #tpu.pipeline_mode<synchronous>, transform_indices = @transform_3, window_bounds = array<i64: 16, 4>}, {pipeline_mode = #tpu.pipeline_mode<synchronous>, transform_indices = @transform_4, window_bounds = array<i64: 1, 4>}, {transform_indices = @transform_5, window_bounds = array<i64: 64, 4>}]} {
    %c0 = arith.constant 0 : index
    %c0_0 = arith.constant 0 : index
    %0 = vector.load %arg1[%c0, %c0_0] : memref<64x4xf32, #tpu.memory_space<vmem>>, vector<64x4xf32>
    %1 = tpu.iota {dimensions = array<i32: 0>} : vector<64x1xi32>
    %c8_i32 = arith.constant 8 : i32
    %c0_i32 = arith.constant 0 : i32
    %2 = arith.cmpi eq, %c8_i32, %c0_i32 : i32
    %c1_i32 = arith.constant 1 : i32
    %3 = arith.select %2, %c1_i32, %c8_i32 : i32
    %4 = vector.broadcast %3 : i32 to vector<64x1xi32>
    %5 = arith.remsi %1, %4 : vector<64x1xi32>
    %c0_i32_1 = arith.constant 0 : i32
    %6 = vector.broadcast %c0_i32_1 : i32 to vector<64x1xi32>
    %7 = arith.cmpi ne, %5, %6 : vector<64x1xi32>
    %c0_i32_2 = arith.constant 0 : i32
    %8 = vector.broadcast %c0_i32_2 : i32 to vector<64x1xi32>
    %9 = arith.cmpi slt, %5, %8 : vector<64x1xi32>
    %c0_i32_3 = arith.constant 0 : i32
    %10 = arith.cmpi slt, %3, %c0_i32_3 : i32
    %11 = vector.broadcast %10 : i1 to vector<64x1xi1>
    %12 = vector.broadcast %11 : vector<64x1xi1> to vector<64x1xi1>
    %13 = arith.xori %9, %12 : vector<64x1xi1>
    %14 = arith.andi %13, %7 : vector<64x1xi1>
    %15 = vector.broadcast %3 : i32 to vector<64x1xi32>
    %16 = arith.addi %5, %15 : vector<64x1xi32>
    %17 = arith.select %14, %16, %5 : vector<64x1xi1>, vector<64x1xi32>
    %c0_i32_4 = arith.constant 0 : i32
    %18 = vector.broadcast %c0_i32_4 : i32 to vector<64x1xi32>
    %19 = arith.cmpi eq, %17, %18 : vector<64x1xi32>
    %c1_i32_5 = arith.constant 1 : i32
    %20 = tpu.dynamic_rotate %0 by %c1_i32_5 dim 0 : vector<64x4xf32>, i32 -> vector<64x4xf32>
    %c0_i32_6 = arith.constant 0 : i32
    %21 = arith.sitofp %c0_i32_6 : i32 to f32
    %22 = vector.shape_cast %19 : vector<64x1xi1> to vector<64x1xi1>
    %23 = vector.broadcast %22 : vector<64x1xi1> to vector<64x4xi1>
    %24 = vector.broadcast %21 : f32 to vector<64x4xf32>
    %25 = arith.select %23, %24, %20 : vector<64x4xi1>, vector<64x4xf32>
    %c7_i32 = arith.constant 7 : i32
    %26 = vector.broadcast %c7_i32 : i32 to vector<64x1xi32>
    %27 = arith.cmpi eq, %17, %26 : vector<64x1xi32>
    %c63_i32 = arith.constant 63 : i32
    %28 = tpu.dynamic_rotate %0 by %c63_i32 dim 0 : vector<64x4xf32>, i32 -> vector<64x4xf32>
    %c0_i32_7 = arith.constant 0 : i32
    %29 = arith.sitofp %c0_i32_7 : i32 to f32
    %30 = vector.shape_cast %27 : vector<64x1xi1> to vector<64x1xi1>
    %31 = vector.broadcast %30 : vector<64x1xi1> to vector<64x4xi1>
    %32 = vector.broadcast %29 : f32 to vector<64x4xf32>
    %33 = arith.select %31, %32, %28 : vector<64x4xi1>, vector<64x4xf32>
    %c1 = arith.constant 1 : index
    %c0_8 = arith.constant 0 : index
    %c0_9 = arith.constant 0 : index
    %34 = vector.load %arg2[%c1, %c0_8, %c0_9] : memref<3x4x16xf32, #tpu.memory_space<vmem>>, vector<1x4x16xf32>
    %35 = vector.shape_cast %34 : vector<1x4x16xf32> to vector<4x16xf32>
    %cst = arith.constant dense<0.000000e+00> : vector<64x16xf32>
    %36 = tpu.matmul %0, %35, %cst {dimension_numbers = #tpu.dot_dimension_numbers<[1], [0], [0], [1], [0, 0, 1, 1], [], []>} : vector<64x4xf32>, vector<4x16xf32>, vector<64x16xf32> -> vector<64x16xf32>
    %c0_10 = arith.constant 0 : index
    %c0_11 = arith.constant 0 : index
    %c0_12 = arith.constant 0 : index
    %37 = vector.load %arg2[%c0_10, %c0_11, %c0_12] : memref<3x4x16xf32, #tpu.memory_space<vmem>>, vector<1x4x16xf32>
    %38 = vector.shape_cast %37 : vector<1x4x16xf32> to vector<4x16xf32>
    %cst_13 = arith.constant dense<0.000000e+00> : vector<64x16xf32>
    %39 = tpu.matmul %25, %38, %cst_13 {dimension_numbers = #tpu.dot_dimension_numbers<[1], [0], [0], [1], [0, 0, 1, 1], [], []>} : vector<64x4xf32>, vector<4x16xf32>, vector<64x16xf32> -> vector<64x16xf32>
    %40 = arith.addf %36, %39 : vector<64x16xf32>
    %c2 = arith.constant 2 : index
    %c0_14 = arith.constant 0 : index
    %c0_15 = arith.constant 0 : index
    %41 = vector.load %arg2[%c2, %c0_14, %c0_15] : memref<3x4x16xf32, #tpu.memory_space<vmem>>, vector<1x4x16xf32>
    %42 = vector.shape_cast %41 : vector<1x4x16xf32> to vector<4x16xf32>
    %cst_16 = arith.constant dense<0.000000e+00> : vector<64x16xf32>
    %43 = tpu.matmul %33, %42, %cst_16 {dimension_numbers = #tpu.dot_dimension_numbers<[1], [0], [0], [1], [0, 0, 1, 1], [], []>} : vector<64x4xf32>, vector<4x16xf32>, vector<64x16xf32> -> vector<64x16xf32>
    %44 = arith.addf %40, %43 : vector<64x16xf32>
    %c0_17 = arith.constant 0 : index
    %c0_18 = arith.constant 0 : index
    %45 = vector.load %arg3[%c0_17, %c0_18] : memref<1x16xf32, #tpu.memory_space<vmem>>, vector<1x16xf32>
    %46 = vector.broadcast %45 : vector<1x16xf32> to vector<64x16xf32>
    %47 = arith.addf %44, %46 : vector<64x16xf32>
    %48 = arith.negf %47 : vector<64x16xf32>
    %49 = math.exp %48 : vector<64x16xf32>
    %cst_19 = arith.constant 1.000000e+00 : f32
    %50 = vector.broadcast %cst_19 : f32 to vector<64x16xf32>
    %51 = arith.addf %50, %49 : vector<64x16xf32>
    %52 = arith.divf %50, %51 : vector<64x16xf32>
    %53 = arith.mulf %47, %52 : vector<64x16xf32>
    %c0_20 = arith.constant 0 : index
    %c0_21 = arith.constant 0 : index
    %54 = vector.load %arg4[%c0_20, %c0_21] : memref<16x4xf32, #tpu.memory_space<vmem>>, vector<16x4xf32>
    %cst_22 = arith.constant dense<0.000000e+00> : vector<64x4xf32>
    %55 = tpu.matmul %53, %54, %cst_22 {dimension_numbers = #tpu.dot_dimension_numbers<[1], [0], [0], [1], [0, 0, 1, 1], [], []>} : vector<64x16xf32>, vector<16x4xf32>, vector<64x4xf32> -> vector<64x4xf32>
    %c0_23 = arith.constant 0 : index
    %c0_24 = arith.constant 0 : index
    %56 = vector.load %arg5[%c0_23, %c0_24] : memref<1x4xf32, #tpu.memory_space<vmem>>, vector<1x4xf32>
    %57 = vector.broadcast %56 : vector<1x4xf32> to vector<64x4xf32>
    %58 = arith.addf %55, %57 : vector<64x4xf32>
    %c0_25 = arith.constant 0 : index
    %c0_26 = arith.constant 0 : index
    %59 = vector.load %arg1[%c0_25, %c0_26] : memref<64x4xf32, #tpu.memory_space<vmem>>, vector<64x4xf32>
    %60 = arith.addf %59, %58 : vector<64x4xf32>
    %c0_27 = arith.constant 0 : index
    %c0_28 = arith.constant 0 : index
    %61 = vector.load %arg6[%c0_27, %c0_28] : memref<64x4xf32, #tpu.memory_space<vmem>>, vector<64x4xf32>
    tpu.vector_store %arg6[%c0_27, %c0_28], %60 {strides = array<i32>} : memref<64x4xf32, #tpu.memory_space<vmem>>, vector<64x4xf32>,
    return
  }
  func.func @transform_0(%arg0: i32) -> (i32, i32) {
    %c0_i32 = arith.constant 0 : i32
    %c0_i32_0 = arith.constant 0 : i32
    return %arg0, %c0_i32 : i32, i32
  }
  func.func @transform_1(%arg0: i32) -> (i32, i32, i32) {
    %c0_i32 = arith.constant 0 : i32
    %c0_i32_0 = arith.constant 0 : i32
    %c0_i32_1 = arith.constant 0 : i32
    %c0_i32_2 = arith.constant 0 : i32
    return %c0_i32, %c0_i32_0, %c0_i32_1 : i32, i32, i32
  }
  func.func @transform_2(%arg0: i32) -> (i32, i32) {
    %c0_i32 = arith.constant 0 : i32
    %c0_i32_0 = arith.constant 0 : i32
    %c0_i32_1 = arith.constant 0 : i32
    return %c0_i32, %c0_i32_0 : i32, i32
  }
  func.func @transform_3(%arg0: i32) -> (i32, i32) {
    %c0_i32 = arith.constant 0 : i32
    %c0_i32_0 = arith.constant 0 : i32
    %c0_i32_1 = arith.constant 0 : i32
    return %c0_i32, %c0_i32_0 : i32, i32
  }
  func.func @transform_4(%arg0: i32) -> (i32, i32) {
    %c0_i32 = arith.constant 0 : i32
    %c0_i32_0 = arith.constant 0 : i32
    %c0_i32_1 = arith.constant 0 : i32
    return %c0_i32, %c0_i32_0 : i32, i32
  }
  func.func @transform_5(%arg0: i32) -> (i32, i32) {
    %c0_i32 = arith.constant 0 : i32
    %c0_i32_0 = arith.constant 0 : i32
    return %arg0, %c0_i32 : i32, i32
  }
}

</mosaic_0001>

<llo_original>
// kernel: tpu_custom_call.1
$region0: #{tpu_custom_call.1}
  #allocation0 [shape = 'u32[]', space=smem, size = 0x4, offset = 0x4, fixed_abs, tag = 'smem constant byte address 0x4 - core index']
  #allocation1 [shape = 'u32[144,128]{1,0:T(1,128)}', space=vmem, size = 0x12000, scoped, tag = 'internal scratch']
  %s0 = inlined_call_operand.vmem [shape: f32[256,4], index: 0, kind: input, shape index: {}]
  %s1 = inlined_call_operand.vmem [shape: f32[3,4,16], index: 1, kind: input, shape index: {}]
  %s2 = inlined_call_operand.vmem [shape: f32[1,16], index: 2, kind: input, shape index: {}]
  %s3 = inlined_call_operand.vmem [shape: f32[16,4], index: 3, kind: input, shape index: {}]
  %s4 = inlined_call_operand.vmem [shape: f32[1,4], index: 4, kind: input, shape index: {}]
  %s5 = inlined_call_operand.vmem [shape: f32[256,4], index: 5, kind: output, shape index: {}]
  %s6 = sld [smem:[#allocation0]]
  $region53: #{tpu_custom_call.1} parent=0
    _
  %s8 = ssub.s32 1, %s6
  %s9 = scalar_select 0, %s8, %s6
  loop: start=0, step=1, limit=6
  $region2: #{tpu_custom_call.1} parent=0 // loop_pre_header
    _
  $region3: #{tpu_custom_call.1} parent=0 // loop_header
    %s11 = sphi 0, %s15
    %p12 = scmp.ge.s32.totalorder %s11, 6
    %s21 = sphi 0, %s23
    %s24 = sphi 0, %s21
    %s25 = sphi 0, %s24
    %s41 = sphi 0, %s25
    %s45 = sphi 0, %s45
    %s47 = sphi 0, %s45
    %s48 = sphi 0, %s47
    %s62 = sphi 0, %s48
    %s66 = sphi 0, %s66
    %s68 = sphi 0, %s66
    %s69 = sphi 0, %s68
    %s83 = sphi 0, %s69
    %s87 = sphi 0, %s87
    %s89 = sphi 0, %s87
    %s90 = sphi 0, %s89
    %s104 = sphi 0, %s90
    %s108 = sphi 0, %s108
    %s110 = sphi 0, %s108
    %s111 = sphi 0, %s110
    %s125 = sphi 0, %s111
    %s131 = sphi 0, %s133
    %s134 = sphi 0, %s131
    %s135 = sphi 0, %s134
    %s151 = sphi 0, %s135
  $region4: #{tpu_custom_call.1} parent=0 // loop_header_branch
    %14 = sbr.rel (%p12) target = $region8
  $region5: #{tpu_custom_call.1} parent=0 // loop_body
    %s16 = ssub.s32 %s11, 1
    %s17 = ssub.s32 %s11, 2
    %s18 = sadd.s32 %s11, 1
    %s19 = ssub.s32 %s11, %s18
    %p20 = scmp.eq.s32.totalorder %s19, 0
    %s22 = sadd.s32 %s21, 1
    %s23 = scalar_select %p20, %s21, %s22
    %p26 = pneg %p20
    %p27 = scmp.eq.s32.totalorder %s11, 3
    %p28 = por %p26, %p27
    %p29 = scmp.ne.s32.totalorder %s21, %s24
    %p30 = scmp.eq.s32.totalorder %s11, 0
    %p31 = por %p29, %p30
    %p32 = scmp.ne.s32.totalorder %s21, %s24
    %p33 = scmp.eq.s32.totalorder %s16, 3
    %p34 = por %p32, %p33
    %p35 = scmp.ne.s32.totalorder %s24, %s25
    %p36 = scmp.eq.s32.totalorder %s16, 0
    %p37 = por %p35, %p36
    %p38 = scmp.ne.s32.totalorder %s24, %s25
    %p39 = scmp.eq.s32.totalorder %s17, 3
    %p40 = por %p38, %p39
    %p42 = scmp.ne.s32.totalorder %s25, %s41
    %p43 = scmp.eq.s32.totalorder %s17, 0
    %p44 = por %p42, %p43
    %s46 = sadd.s32 %s45, 1
    %p49 = scmp.eq.s32.totalorder %s11, 3
    %p50 = scmp.ne.s32.totalorder %s45, %s47
    %p51 = scmp.eq.s32.totalorder %s11, 0
    %p52 = por %p50, %p51
    %p53 = scmp.ne.s32.totalorder %s45, %s47
    %p54 = scmp.eq.s32.totalorder %s16, 3
    %p55 = por %p53, %p54
    %p56 = scmp.ne.s32.totalorder %s47, %s48
    %p57 = scmp.eq.s32.totalorder %s16, 0
    %p58 = por %p56, %p57
    %p59 = scmp.ne.s32.totalorder %s47, %s48
    %p60 = scmp.eq.s32.totalorder %s17, 3
    %p61 = por %p59, %p60
    %p63 = scmp.ne.s32.totalorder %s48, %s62
    %p64 = scmp.eq.s32.totalorder %s17, 0
    %p65 = por %p63, %p64
    %s67 = sadd.s32 %s66, 1
    %p70 = scmp.eq.s32.totalorder %s11, 3
    %p71 = scmp.ne.s32.totalorder %s66, %s68
    %p72 = scmp.eq.s32.totalorder %s11, 0
    %p73 = por %p71, %p72
    %p74 = scmp.ne.s32.totalorder %s66, %s68
    %p75 = scmp.eq.s32.totalorder %s16, 3
    %p76 = por %p74, %p75
    %p77 = scmp.ne.s32.totalorder %s68, %s69
    %p78 = scmp.eq.s32.totalorder %s16, 0
    %p79 = por %p77, %p78
    %p80 = scmp.ne.s32.totalorder %s68, %s69
    %p81 = scmp.eq.s32.totalorder %s17, 3
    %p82 = por %p80, %p81
    %p84 = scmp.ne.s32.totalorder %s69, %s83
    %p85 = scmp.eq.s32.totalorder %s17, 0
    %p86 = por %p84, %p85
    %s88 = sadd.s32 %s87, 1
    %p91 = scmp.eq.s32.totalorder %s11, 3
    %p92 = scmp.ne.s32.totalorder %s87, %s89
    %p93 = scmp.eq.s32.totalorder %s11, 0
    %p94 = por %p92, %p93
    %p95 = scmp.ne.s32.totalorder %s87, %s89
    %p96 = scmp.eq.s32.totalorder %s16, 3
    %p97 = por %p95, %p96
    %p98 = scmp.ne.s32.totalorder %s89, %s90
    %p99 = scmp.eq.s32.totalorder %s16, 0
    %p100 = por %p98, %p99
    %p101 = scmp.ne.s32.totalorder %s89, %s90
    %p102 = scmp.eq.s32.totalorder %s17, 3
    %p103 = por %p101, %p102
    %p105 = scmp.ne.s32.totalorder %s90, %s104
    %p106 = scmp.eq.s32.totalorder %s17, 0
    %p107 = por %p105, %p106
    %s109 = sadd.s32 %s108, 1
    %p112 = scmp.eq.s32.totalorder %s11, 3
    %p113 = scmp.ne.s32.totalorder %s108, %s110
    %p114 = scmp.eq.s32.totalorder %s11, 0
    %p115 = por %p113, %p114
    %p116 = scmp.ne.s32.totalorder %s108, %s110
    %p117 = scmp.eq.s32.totalorder %s16, 3
    %p118 = por %p116, %p117
    %p119 = scmp.ne.s32.totalorder %s110, %s111
    %p120 = scmp.eq.s32.totalorder %s16, 0
    %p121 = por %p119, %p120
    %p122 = scmp.ne.s32.totalorder %s110, %s111
    %p123 = scmp.eq.s32.totalorder %s17, 3
    %p124 = por %p122, %p123
    %p126 = scmp.ne.s32.totalorder %s111, %s125
    %p127 = scmp.eq.s32.totalorder %s17, 0
    %p128 = por %p126, %p127
    %s129 = ssub.s32 %s11, %s18
    %p130 = scmp.eq.s32.totalorder %s129, 0
    %s132 = sadd.s32 %s131, 1
    %s133 = scalar_select %p130, %s131, %s132
    %p136 = pneg %p130
    %p137 = scmp.eq.s32.totalorder %s11, 3
    %p138 = por %p136, %p137
    %p139 = scmp.ne.s32.totalorder %s131, %s134
    %p140 = scmp.eq.s32.totalorder %s11, 0
    %p141 = por %p139, %p140
    %p142 = scmp.ne.s32.totalorder %s131, %s134
    %p143 = scmp.eq.s32.totalorder %s16, 3
    %p144 = por %p142, %p143
    %p145 = scmp.ne.s32.totalorder %s134, %s135
    %p146 = scmp.eq.s32.totalorder %s16, 0
    %p147 = por %p145, %p146
    %p148 = scmp.ne.s32.totalorder %s134, %s135
    %p149 = scmp.eq.s32.totalorder %s17, 3
    %p150 = por %p148, %p149
    %p152 = scmp.ne.s32.totalorder %s135, %s151
    %p153 = scmp.eq.s32.totalorder %s17, 0
    %p154 = por %p152, %p153
    %p155 = scmp.le.s32.totalorder 1, %s11
    %p156 = scmp.lt.s32.totalorder %s11, 5
    %p157 = pnand %p155, %p156
    %p158 = pneg %p157
    // Predicated region
    $region9: #{tpu_custom_call.1} parent=5 // pred_check
      _
    $region10: #{tpu_custom_call.1} parent=5 // pred_check_branch
      %160 = sbr.rel (%p157) target = $region12
    $region11: #{tpu_custom_call.1} parent=5 // pred_region
      %s161 = ssub.s32 %s11, 1
      // Predicated region
      $region13: #{tpu_custom_call.1} parent=11 // pred_check
        %p162 = pneg %p58
      $region14: #{tpu_custom_call.1} parent=11 // pred_check_branch
        %164 = sbr.rel (%p162) target = $region16
      $region15: #{tpu_custom_call.1} parent=11 // pred_region
        _
      $region16: #{tpu_custom_call.1} parent=11 // pred_fallthru
        _
      // Predicated region
      $region17: #{tpu_custom_call.1} parent=11 // pred_check
        %p165 = pneg %p79
      $region18: #{tpu_custom_call.1} parent=11 // pred_check_branch
        %167 = sbr.rel (%p165) target = $region20
      $region19: #{tpu_custom_call.1} parent=11 // pred_region
        _
      $region20: #{tpu_custom_call.1} parent=11 // pred_fallthru
        _
      // Predicated region
      $region21: #{tpu_custom_call.1} parent=11 // pred_check
        %p168 = pneg %p100
      $region22: #{tpu_custom_call.1} parent=11 // pred_check_branch
        %170 = sbr.rel (%p168) target = $region24
      $region23: #{tpu_custom_call.1} parent=11 // pred_region
        _
      $region24: #{tpu_custom_call.1} parent=11 // pred_fallthru
        _
      // Predicated region
      $region25: #{tpu_custom_call.1} parent=11 // pred_check
        %p171 = pneg %p121
      $region26: #{tpu_custom_call.1} parent=11 // pred_check_branch
        %173 = sbr.rel (%p171) target = $region28
      $region27: #{tpu_custom_call.1} parent=11 // pred_region
        _
      $region28: #{tpu_custom_call.1} parent=11 // pred_fallthru
        _
    $region12: #{tpu_custom_call.1} parent=5 // pred_fallthru
      _
    %p174 = scmp.lt.s32.totalorder %s11, 4
    // Predicated region
    $region29: #{tpu_custom_call.1} parent=5 // pred_check
      %p175 = pneg %p174
    $region30: #{tpu_custom_call.1} parent=5 // pred_check_branch
      %177 = sbr.rel (%p175) target = $region32
    $region31: #{tpu_custom_call.1} parent=5 // pred_region
      // Predicated region
      $region33: #{tpu_custom_call.1} parent=31 // pred_check
        %p178 = pneg %p31
      $region34: #{tpu_custom_call.1} parent=31 // pred_check_branch
        %180 = sbr.rel (%p178) target = $region36
      $region35: #{tpu_custom_call.1} parent=31 // pred_region
        %s181 = smul.u32 8, %s11
        %p182 = scmp.lt.s32.totalorder %s181, 31
        %s183 = scalar_select %p182, %s181, 31
        %s184 = smul.addr %s183, 8
        %s185 = scalar_lea.vmem %s0, %s184
        %s186 = smul.u32 8, %s11
      $region36: #{tpu_custom_call.1} parent=31 // pred_fallthru
        _
    $region32: #{tpu_custom_call.1} parent=5 // pred_fallthru
      _
    %p187 = scmp.le.s32.totalorder 1, %s11
    %p188 = scmp.lt.s32.totalorder %s11, 5
    %p189 = pnand %p187, %p188
    %p190 = pneg %p189
    // Predicated region
    $region37: #{tpu_custom_call.1} parent=5 // pred_check
      _
    $region38: #{tpu_custom_call.1} parent=5 // pred_check_branch
      %192 = sbr.rel (%p189) target = $region40
    $region39: #{tpu_custom_call.1} parent=5 // pred_region
      %s193 = ssub.s32 %s11, 1
      %s194 = smul.u32 8, %s16
      %p195 = scmp.lt.s32.totalorder %s194, 31
      %s196 = scalar_select %p195, %s194, 31
      %s197 = smul.addr %s196, 8
      %s198 = scalar_lea.vmem %s0, %s197
      %p199 = pneg %p37
      %p200 = pneg %p34
      %p201 = pneg %p58
      %p202 = pneg %p55
      %p203 = pneg %p79
      %p204 = pneg %p76
      %p205 = pneg %p100
      %p206 = pneg %p97
      %p207 = pneg %p121
      %p208 = pneg %p118
      %p209 = pneg %p147
      %p210 = pneg %p144
      %s211 = smul.u32 8, %s16
      %p212 = scmp.lt.s32.totalorder %s211, 31
      %s213 = scalar_select %p212, %s211, 31
      %s214 = smul.addr %s213, 8
      %s215 = scalar_lea.vmem %s5, %s214
      %s216 = smul.u32 8, %s16
      %p217 = scmp.lt.s32.totalorder %s216, 31
      %s218 = scalar_select %p217, %s216, 31
      %s219 = smul.addr %s218, 8
      %s220 = scalar_lea.vmem %s0, %s219
      %s221 = smul.u32 8, %s16
      %s222 = smul.u32 8, %s16
      %p223 = scmp.lt.s32.totalorder %s222, 31
      %s224 = scalar_select %p223, %s222, 31
      %s225 = smul.addr %s224, 8
      %s226 = scalar_lea.vmem %s5, %s225
      %s227 = smul.u32 8, %s16
      %v228 = vld [vmem:[%s220] sm:$0xff]
      %v229 = vld [vmem:[%s220 + $0x8] sm:$0xff]
      %v230 = vld [vmem:[%s220 + $0x10] sm:$0xff]
      %v231 = vld [vmem:[%s220 + $0x18] sm:$0xff]
      %v232 = vld [vmem:[%s220 + $0x20] sm:$0xff]
      %v233 = vld [vmem:[%s220 + $0x28] sm:$0xff]
      %v234 = vld [vmem:[%s220 + $0x30] sm:$0xff]
      %v235 = vld [vmem:[%s220 + $0x38] sm:$0xff]
      %v236 = vlaneseq
      %v237 = vshrl.u32 %v236, 7
      %v238 = vadd.s32 %v237, 8
      %v239 = vadd.s32 %v237, 16
      %v240 = vadd.s32 %v237, 24
      %v241 = vadd.s32 %v237, 32
      %v242 = vadd.s32 %v237, 40
      %v243 = vadd.s32 %v237, 48
      %v244 = vadd.s32 %v237, 56
      %vm245 = vcmp.lt.s32.totalorder %v237, 0
      %v246 = vsub.s32 0, %v237
      %v247 = vsel %vm245, %v246, %v237
      %v248 = vshrl.u32 %v247, 3
      %v249 = vand.u32 %v247, 7
      %v250 = vsub.s32 0, %v249
      %v251 = vsel %vm245, %v250, %v249
      %vm252 = vcmp.lt.s32.totalorder %v238, 0
      %v253 = vsub.s32 0, %v238
      %v254 = vsel %vm252, %v253, %v238
      %v255 = vshrl.u32 %v254, 3
      %v256 = vand.u32 %v254, 7
      %v257 = vsub.s32 0, %v256
      %v258 = vsel %vm252, %v257, %v256
      %vm259 = vcmp.lt.s32.totalorder %v239, 0
      %v260 = vsub.s32 0, %v239
      %v261 = vsel %vm259, %v260, %v239
      %v262 = vshrl.u32 %v261, 3
      %v263 = vand.u32 %v261, 7
      %v264 = vsub.s32 0, %v263
      %v265 = vsel %vm259, %v264, %v263
      %vm266 = vcmp.lt.s32.totalorder %v240, 0
      %v267 = vsub.s32 0, %v240
      %v268 = vsel %vm266, %v267, %v240
      %v269 = vshrl.u32 %v268, 3
      %v270 = vand.u32 %v268, 7
      %v271 = vsub.s32 0, %v270
      %v272 = vsel %vm266, %v271, %v270
      %vm273 = vcmp.lt.s32.totalorder %v241, 0
      %v274 = vsub.s32 0, %v241
      %v275 = vsel %vm273, %v274, %v241
      %v276 = vshrl.u32 %v275, 3
      %v277 = vand.u32 %v275, 7
      %v278 = vsub.s32 0, %v277
      %v279 = vsel %vm273, %v278, %v277
      %vm280 = vcmp.lt.s32.totalorder %v242, 0
      %v281 = vsub.s32 0, %v242
      %v282 = vsel %vm280, %v281, %v242
      %v283 = vshrl.u32 %v282, 3
      %v284 = vand.u32 %v282, 7
      %v285 = vsub.s32 0, %v284
      %v286 = vsel %vm280, %v285, %v284
      %vm287 = vcmp.lt.s32.totalorder %v243, 0
      %v288 = vsub.s32 0, %v243
      %v289 = vsel %vm287, %v288, %v243
      %v290 = vshrl.u32 %v289, 3
      %v291 = vand.u32 %v289, 7
      %v292 = vsub.s32 0, %v291
      %v293 = vsel %vm287, %v292, %v291
      %vm294 = vcmp.lt.s32.totalorder %v244, 0
      %v295 = vsub.s32 0, %v244
      %v296 = vsel %vm294, %v295, %v244
      %v297 = vshrl.u32 %v296, 3
      %v298 = vand.u32 %v296, 7
      %v299 = vsub.s32 0, %v298
      %v300 = vsel %vm294, %v299, %v298
      %vm301 = vcmp.ne.s32.totalorder %v251, 0
      %vm302 = vcmp.ne.s32.totalorder %v258, 0
      %vm303 = vcmp.ne.s32.totalorder %v265, 0
      %vm304 = vcmp.ne.s32.totalorder %v272, 0
      %vm305 = vcmp.ne.s32.totalorder %v279, 0
      %vm306 = vcmp.ne.s32.totalorder %v286, 0
      %vm307 = vcmp.ne.s32.totalorder %v293, 0
      %vm308 = vcmp.ne.s32.totalorder %v300, 0
      %vm309 = vcmp.lt.s32.totalorder %v251, 0
      %vm310 = vcmp.lt.s32.totalorder %v258, 0
      %vm311 = vcmp.lt.s32.totalorder %v265, 0
      %vm312 = vcmp.lt.s32.totalorder %v272, 0
      %vm313 = vcmp.lt.s32.totalorder %v279, 0
      %vm314 = vcmp.lt.s32.totalorder %v286, 0
      %vm315 = vcmp.lt.s32.totalorder %v293, 0
      %vm316 = vcmp.lt.s32.totalorder %v300, 0
      %vm317 = vmand %vm309, %vm301
      %vm318 = vmand %vm310, %vm302
      %vm319 = vmand %vm311, %vm303
      %vm320 = vmand %vm312, %vm304
      %vm321 = vmand %vm313, %vm305
      %vm322 = vmand %vm314, %vm306
      %vm323 = vmand %vm315, %vm307
      %vm324 = vmand %vm316, %vm308
      %v325 = vadd.s32 %v251, 8
      %v326 = vadd.s32 %v258, 8
      %v327 = vadd.s32 %v265, 8
      %v328 = vadd.s32 %v272, 8
      %v329 = vadd.s32 %v279, 8
      %v330 = vadd.s32 %v286, 8
      %v331 = vadd.s32 %v293, 8
      %v332 = vadd.s32 %v300, 8
      %v333 = vsel %vm317, %v325, %v251
      %v334 = vsel %vm318, %v326, %v258
      %v335 = vsel %vm319, %v327, %v265
      %v336 = vsel %vm320, %v328, %v272
      %v337 = vsel %vm321, %v329, %v279
      %v338 = vsel %vm322, %v330, %v286
      %v339 = vsel %vm323, %v331, %v293
      %v340 = vsel %vm324, %v332, %v300
      %vm341 = vcmp.eq.s32.totalorder %v333, 0
      %vm342 = vcmp.eq.s32.totalorder %v334, 0
      %vm343 = vcmp.eq.s32.totalorder %v335, 0
      %vm344 = vcmp.eq.s32.totalorder %v336, 0
      %vm345 = vcmp.eq.s32.totalorder %v337, 0
      %vm346 = vcmp.eq.s32.totalorder %v338, 0
      %vm347 = vcmp.eq.s32.totalorder %v339, 0
      %vm348 = vcmp.eq.s32.totalorder %v340, 0
      %v349 = vrot.slane %v228, 7
      %v350 = vrot.slane %v229, 7
      %v351 = vrot.slane %v230, 7
      %v352 = vrot.slane %v231, 7
      %v353 = vrot.slane %v232, 7
      %v354 = vrot.slane %v233, 7
      %v355 = vrot.slane %v234, 7
      %v356 = vrot.slane %v235, 7
      %vm357 = vcmp.lt.s32.totalorder %v237, 1
      %v358 = vsel %vm357, %v355, %v356
      %v359 = vsel %vm357, %v354, %v355
      %v360 = vsel %vm357, %v353, %v354
      %v361 = vsel %vm357, %v352, %v353
      %v362 = vsel %vm357, %v351, %v352
      %v363 = vsel %vm357, %v350, %v351
      %v364 = vsel %vm357, %v349, %v350
      %v365 = vsel %vm357, %v356, %v349
      %v366 = vsel %vm341, 1, 0
      %v367 = vsel %vm342, 1, 0
      %v368 = vsel %vm343, 1, 0
      %v369 = vsel %vm344, 1, 0
      %v370 = vsel %vm345, 1, 0
      %v371 = vsel %vm346, 1, 0
      %v372 = vsel %vm347, 1, 0
      %v373 = vsel %vm348, 1, 0
      %vm374 = vcmp.eq.s32.totalorder %v366, 1
      %vm375 = vcmp.eq.s32.totalorder %v367, 1
      %vm376 = vcmp.eq.s32.totalorder %v368, 1
      %vm377 = vcmp.eq.s32.totalorder %v369, 1
      %vm378 = vcmp.eq.s32.totalorder %v370, 1
      %vm379 = vcmp.eq.s32.totalorder %v371, 1
      %vm380 = vcmp.eq.s32.totalorder %v372, 1
      %vm381 = vcmp.eq.s32.totalorder %v373, 1
      %v382 = vsel %vm374, 0.0, %v365
      %v383 = vsel %vm375, 0.0, %v364
      %v384 = vsel %vm376, 0.0, %v363
      %v385 = vsel %vm377, 0.0, %v362
      %v386 = vsel %vm378, 0.0, %v361
      %v387 = vsel %vm379, 0.0, %v360
      %v388 = vsel %vm380, 0.0, %v359
      %v389 = vsel %vm381, 0.0, %v358
      %vm390 = vcmp.eq.s32.totalorder %v333, 7
      %vm391 = vcmp.eq.s32.totalorder %v334, 7
      %vm392 = vcmp.eq.s32.totalorder %v335, 7
      %vm393 = vcmp.eq.s32.totalorder %v336, 7
      %vm394 = vcmp.eq.s32.totalorder %v337, 7
      %vm395 = vcmp.eq.s32.totalorder %v338, 7
      %vm396 = vcmp.eq.s32.totalorder %v339, 7
      %vm397 = vcmp.eq.s32.totalorder %v340, 7
      %v398 = vrot.slane %v228, 1
      %v399 = vrot.slane %v229, 1
      %v400 = vrot.slane %v230, 1
      %v401 = vrot.slane %v231, 1
      %v402 = vrot.slane %v232, 1
      %v403 = vrot.slane %v233, 1
      %v404 = vrot.slane %v234, 1
      %v405 = vrot.slane %v235, 1
      %vm406 = vcmp.lt.s32.totalorder %v237, 7
      %v407 = vsel %vm406, %v404, %v405
      %v408 = vsel %vm406, %v403, %v404
      %v409 = vsel %vm406, %v402, %v403
      %v410 = vsel %vm406, %v401, %v402
      %v411 = vsel %vm406, %v400, %v401
      %v412 = vsel %vm406, %v399, %v400
      %v413 = vsel %vm406, %v398, %v399
      %v414 = vsel %vm406, %v405, %v398
      %v415 = vsel %vm390, 1, 0
      %v416 = vsel %vm391, 1, 0
      %v417 = vsel %vm392, 1, 0
      %v418 = vsel %vm393, 1, 0
      %v419 = vsel %vm394, 1, 0
      %v420 = vsel %vm395, 1, 0
      %v421 = vsel %vm396, 1, 0
      %v422 = vsel %vm397, 1, 0
      %vm423 = vcmp.eq.s32.totalorder %v415, 1
      %vm424 = vcmp.eq.s32.totalorder %v416, 1
      %vm425 = vcmp.eq.s32.totalorder %v417, 1
      %vm426 = vcmp.eq.s32.totalorder %v418, 1
      %vm427 = vcmp.eq.s32.totalorder %v419, 1
      %vm428 = vcmp.eq.s32.totalorder %v420, 1
      %vm429 = vcmp.eq.s32.totalorder %v421, 1
      %vm430 = vcmp.eq.s32.totalorder %v422, 1
      %v431 = vsel %vm423, 0.0, %v413
      %v432 = vsel %vm424, 0.0, %v412
      %v433 = vsel %vm425, 0.0, %v411
      %v434 = vsel %vm426, 0.0, %v410
      %v435 = vsel %vm427, 0.0, %v409
      %v436 = vsel %vm428, 0.0, %v408
      %v437 = vsel %vm429, 0.0, %v407
      %v438 = vsel %vm430, 0.0, %v414
      %s439 = scalar_lea.vmem %s1, 4
      %v440 = vld [vmem:[%s439] sm:$0xf]
      %v441 = vld [vmem:[%s1] sm:$0xf]
      %vm442 = vcmask 31744
      %v444 = vsel %vm442, %v382, 0
      %v447 = vsel %vm442, %v383, 0
      %v450 = vsel %vm442, %v384, 0
      %v453 = vsel %vm442, %v385, 0
      %v456 = vsel %vm442, %v386, 0
      %v459 = vsel %vm442, %v387, 0
      %v462 = vsel %vm442, %v388, 0
      %v465 = vsel %vm442, %v389, 0
      %vm467 = vcmask 1043456
      %v469 = vsel %vm467, %v441, 0
      %471 = vmatprep.subr.mxu0 0.0
      %472 = vmatpush1.msra.mxu0 %v469
      %473 = vmatprep.subr.mxu0 0.0
      %474 = vmatpush1.msra.mxu0 0.0
      %475 = vmatprep.subr.mxu0 0.0
      %476 = vmatpush1.msra.mxu0 0.0
      %477 = vmatprep.subr.mxu0 0.0
      %478 = vmatpush1.msra.mxu0 0.0
      %479 = vmatprep.subr.mxu0 0.0
      %480 = vmatpush1.msra.mxu0 0.0
      %481 = vmatprep.subr.mxu0 0.0
      %482 = vmatpush1.msra.mxu0 0.0
      %483 = vmatprep.subr.mxu0 0.0
      %484 = vmatpush1.msra.mxu0 0.0
      %485 = vmatprep.subr.mxu0 0.0
      %486 = vmatpush1.msra.mxu0 0.0
      %487 = vmatprep.subr.mxu0 0.0
      %488 = vmatpush1.msra.mxu0 0.0
      %489 = vmatprep.subr.mxu0 0.0
      %490 = vmatpush1.msra.mxu0 0.0
      %491 = vmatprep.subr.mxu0 0.0
      %492 = vmatpush1.msra.mxu0 0.0
      %493 = vmatprep.subr.mxu0 0.0
      %494 = vmatpush1.msra.mxu0 0.0
      %495 = vmatprep.subr.mxu0 0.0
      %496 = vmatpush1.msra.mxu0 0.0
      %497 = vmatprep.subr.mxu0 0.0
      %498 = vmatpush1.msra.mxu0 0.0
      %499 = vmatprep.subr.mxu0 0.0
      %500 = vmatpush1.msra.mxu0 0.0
      %501 = vmatprep.subr.mxu0 0.0
      %502 = vmatpush1.msra.mxu0 0.0
      %503 = vmatprep.subr.mxu0 0.0
      %504 = vmatpush1.msra.mxu0 0.0
      %505 = vmatprep.subr.mxu0 0.0
      %506 = vmatpush1.msra.mxu0 0.0
      %507 = vmatprep.subr.mxu0 0.0
      %508 = vmatpush1.msra.mxu0 0.0
      %509 = vmatprep.subr.mxu0 0.0
      %510 = vmatpush1.msra.mxu0 0.0
      %511 = vmatprep.subr.mxu0 0.0
      %512 = vmatpush1.msra.mxu0 0.0
      %513 = vmatprep.subr.mxu0 0.0
      %514 = vmatpush1.msra.mxu0 0.0
      %515 = vmatprep.subr.mxu0 0.0
      %516 = vmatpush1.msra.mxu0 0.0
      %517 = vmatprep.subr.mxu0 0.0
      %518 = vmatpush1.msra.mxu0 0.0
      %519 = vmatprep.subr.mxu0 0.0
      %520 = vmatpush1.msra.mxu0 0.0
      %521 = vmatprep.subr.mxu0 0.0
      %522 = vmatpush1.msra.mxu0 0.0
      %523 = vmatprep.subr.mxu0 0.0
      %524 = vmatpush1.msra.mxu0 0.0
      %525 = vmatprep.subr.mxu0 0.0
      %526 = vmatpush1.msra.mxu0 0.0
      %527 = vmatprep.subr.mxu0 0.0
      %528 = vmatpush1.msra.mxu0 0.0
      %529 = vmatprep.subr.mxu0 0.0
      %530 = vmatpush1.msra.mxu0 0.0
      %531 = vmatprep.subr.mxu0 0.0
      %532 = vmatpush1.msra.mxu0 0.0
      %533 = vmatprep.subr.mxu0 0.0
      %534 = vmatpush1.msra.mxu0 0.0
      %535 = vmatprep.mubr.f32.mxu0 0.0
      %536 = vmatmul.mubr.f32.gmra.mrb[0].mxu0 %v444
      %v537 = vpop.f32.mrb[0].mxu0
      %v538 = vadd.f32 0.0, %v537
      %v539 = vpop.f32.mrb[0].mxu0
      %540 = vmatprep.mubr.f32.mxu0 0.0
      %541 = vmatmul.mubr.f32.gmra.mrb[0].mxu0 %v447
      %v542 = vpop.f32.mrb[0].mxu0
      %v543 = vadd.f32 0.0, %v542
      %v544 = vpop.f32.mrb[0].mxu0
      %545 = vmatprep.mubr.f32.mxu0 0.0
      %546 = vmatmul.mubr.f32.gmra.mrb[0].mxu0 %v450
      %v547 = vpop.f32.mrb[0].mxu0
      %v548 = vadd.f32 0.0, %v547
      %v549 = vpop.f32.mrb[0].mxu0
      %550 = vmatprep.mubr.f32.mxu0 0.0
      %551 = vmatmul.mubr.f32.gmra.mrb[0].mxu0 %v453
      %v552 = vpop.f32.mrb[0].mxu0
      %v553 = vadd.f32 0.0, %v552
      %v554 = vpop.f32.mrb[0].mxu0
      %555 = vmatprep.mubr.f32.mxu0 0.0
      %556 = vmatmul.mubr.f32.gmra.mrb[0].mxu0 %v456
      %v557 = vpop.f32.mrb[0].mxu0
      %v558 = vadd.f32 0.0, %v557
      %v559 = vpop.f32.mrb[0].mxu0
      %560 = vmatprep.mubr.f32.mxu0 0.0
      %561 = vmatmul.mubr.f32.gmra.mrb[0].mxu0 %v459
      %v562 = vpop.f32.mrb[0].mxu0
      %v563 = vadd.f32 0.0, %v562
      %v564 = vpop.f32.mrb[0].mxu0
      %565 = vmatprep.mubr.f32.mxu0 0.0
      %566 = vmatmul.mubr.f32.gmra.mrb[0].mxu0 %v462
      %v567 = vpop.f32.mrb[0].mxu0
      %v568 = vadd.f32 0.0, %v567
      %v569 = vpop.f32.mrb[0].mxu0
      %570 = vmatprep.mubr.f32.mxu0 0.0
      %571 = vmatmul.mubr.f32.gmra.mrb[0].mxu0 %v465
      %v572 = vpop.f32.mrb[0].mxu0
      %v573 = vadd.f32 0.0, %v572
      %v574 = vpop.f32.mrb[0].mxu0
      %575 = vdwg.mxu0
      %v577 = vsel %vm442, %v228, 0
      %v580 = vsel %vm442, %v229, 0
      %v583 = vsel %vm442, %v230, 0
      %v586 = vsel %vm442, %v231, 0
      %v589 = vsel %vm442, %v232, 0
      %v592 = vsel %vm442, %v233, 0
      %v595 = vsel %vm442, %v234, 0
      %v598 = vsel %vm442, %v235, 0
      %v601 = vsel %vm467, %v440, 0
      %603 = vmatprep.subr.mxu0 0.0
      %604 = vmatpush1.msra.mxu0 %v601
      %605 = vmatprep.subr.mxu0 0.0
      %606 = vmatpush1.msra.mxu0 0.0
      %607 = vmatprep.subr.mxu0 0.0
      %608 = vmatpush1.msra.mxu0 0.0
      %609 = vmatprep.subr.mxu0 0.0
      %610 = vmatpush1.msra.mxu0 0.0
      %611 = vmatprep.subr.mxu0 0.0
      %612 = vmatpush1.msra.mxu0 0.0
      %613 = vmatprep.subr.mxu0 0.0
      %614 = vmatpush1.msra.mxu0 0.0
      %615 = vmatprep.subr.mxu0 0.0
      %616 = vmatpush1.msra.mxu0 0.0
      %617 = vmatprep.subr.mxu0 0.0
      %618 = vmatpush1.msra.mxu0 0.0
      %619 = vmatprep.subr.mxu0 0.0
      %620 = vmatpush1.msra.mxu0 0.0
      %621 = vmatprep.subr.mxu0 0.0
      %622 = vmatpush1.msra.mxu0 0.0
      %623 = vmatprep.subr.mxu0 0.0
      %624 = vmatpush1.msra.mxu0 0.0
      %625 = vmatprep.subr.mxu0 0.0
      %626 = vmatpush1.msra.mxu0 0.0
      %627 = vmatprep.subr.mxu0 0.0
      %628 = vmatpush1.msra.mxu0 0.0
      %629 = vmatprep.subr.mxu0 0.0
      %630 = vmatpush1.msra.mxu0 0.0
      %631 = vmatprep.subr.mxu0 0.0
      %632 = vmatpush1.msra.mxu0 0.0
      %633 = vmatprep.subr.mxu0 0.0
      %634 = vmatpush1.msra.mxu0 0.0
      %635 = vmatprep.subr.mxu0 0.0
      %636 = vmatpush1.msra.mxu0 0.0
      %637 = vmatprep.subr.mxu0 0.0
      %638 = vmatpush1.msra.mxu0 0.0
      %639 = vmatprep.subr.mxu0 0.0
      %640 = vmatpush1.msra.mxu0 0.0
      %641 = vmatprep.subr.mxu0 0.0
      %642 = vmatpush1.msra.mxu0 0.0
      %643 = vmatprep.subr.mxu0 0.0
      %644 = vmatpush1.msra.mxu0 0.0
      %645 = vmatprep.subr.mxu0 0.0
      %646 = vmatpush1.msra.mxu0 0.0
      %647 = vmatprep.subr.mxu0 0.0
      %648 = vmatpush1.msra.mxu0 0.0
      %649 = vmatprep.subr.mxu0 0.0
      %650 = vmatpush1.msra.mxu0 0.0
      %651 = vmatprep.subr.mxu0 0.0
      %652 = vmatpush1.msra.mxu0 0.0
      %653 = vmatprep.subr.mxu0 0.0
      %654 = vmatpush1.msra.mxu0 0.0
      %655 = vmatprep.subr.mxu0 0.0
      %656 = vmatpush1.msra.mxu0 0.0
      %657 = vmatprep.subr.mxu0 0.0
      %658 = vmatpush1.msra.mxu0 0.0
      %659 = vmatprep.subr.mxu0 0.0
      %660 = vmatpush1.msra.mxu0 0.0
      %661 = vmatprep.subr.mxu0 0.0
      %662 = vmatpush1.msra.mxu0 0.0
      %663 = vmatprep.subr.mxu0 0.0
      %664 = vmatpush1.msra.mxu0 0.0
      %665 = vmatprep.subr.mxu0 0.0
      %666 = vmatpush1.msra.mxu0 0.0
      %667 = vmatprep.mubr.f32.mxu0 0.0
      %668 = vmatmul.mubr.f32.gmra.mrb[0].mxu0 %v577
      %v669 = vpop.f32.mrb[0].mxu0
      %v670 = vadd.f32 %v538, %v669
      %v671 = vpop.f32.mrb[0].mxu0
      %672 = vmatprep.mubr.f32.mxu0 0.0
      %673 = vmatmul.mubr.f32.gmra.mrb[0].mxu0 %v580
      %v674 = vpop.f32.mrb[0].mxu0
      %v675 = vadd.f32 %v543, %v674
      %v676 = vpop.f32.mrb[0].mxu0
      %677 = vmatprep.mubr.f32.mxu0 0.0
      %678 = vmatmul.mubr.f32.gmra.mrb[0].mxu0 %v583
      %v679 = vpop.f32.mrb[0].mxu0
      %v680 = vadd.f32 %v548, %v679
      %v681 = vpop.f32.mrb[0].mxu0
      %682 = vmatprep.mubr.f32.mxu0 0.0
      %683 = vmatmul.mubr.f32.gmra.mrb[0].mxu0 %v586
      %v684 = vpop.f32.mrb[0].mxu0
      %v685 = vadd.f32 %v553, %v684
      %v686 = vpop.f32.mrb[0].mxu0
      %687 = vmatprep.mubr.f32.mxu0 0.0
      %688 = vmatmul.mubr.f32.gmra.mrb[0].mxu0 %v589
      %v689 = vpop.f32.mrb[0].mxu0
      %v690 = vadd.f32 %v558, %v689
      %v691 = vpop.f32.mrb[0].mxu0
      %692 = vmatprep.mubr.f32.mxu0 0.0
      %693 = vmatmul.mubr.f32.gmra.mrb[0].mxu0 %v592
      %v694 = vpop.f32.mrb[0].mxu0
      %v695 = vadd.f32 %v563, %v694
      %v696 = vpop.f32.mrb[0].mxu0
      %697 = vmatprep.mubr.f32.mxu0 0.0
      %698 = vmatmul.mubr.f32.gmra.mrb[0].mxu0 %v595
      %v699 = vpop.f32.mrb[0].mxu0
      %v700 = vadd.f32 %v568, %v699
      %v701 = vpop.f32.mrb[0].mxu0
      %702 = vmatprep.mubr.f32.mxu0 0.0
      %703 = vmatmul.mubr.f32.gmra.mrb[0].mxu0 %v598
      %v704 = vpop.f32.mrb[0].mxu0
      %v705 = vadd.f32 %v573, %v704
      %v706 = vpop.f32.mrb[0].mxu0
      %707 = vdwg.mxu0
      %s708 = scalar_lea.vmem %s1, 8
      %v709 = vld [vmem:[%s708] sm:$0xf]
      %v711 = vsel %vm442, %v431, 0
      %v714 = vsel %vm442, %v432, 0
      %v717 = vsel %vm442, %v433, 0
      %v720 = vsel %vm442, %v434, 0
      %v723 = vsel %vm442, %v435, 0
      %v726 = vsel %vm442, %v436, 0
      %v729 = vsel %vm442, %v437, 0
      %v732 = vsel %vm442, %v438, 0
      %v735 = vsel %vm467, %v709, 0
      %737 = vmatprep.subr.mxu0 0.0
      %738 = vmatpush1.msra.mxu0 %v735
      %739 = vmatprep.subr.mxu0 0.0
      %740 = vmatpush1.msra.mxu0 0.0
      %741 = vmatprep.subr.mxu0 0.0
      %742 = vmatpush1.msra.mxu0 0.0
      %743 = vmatprep.subr.mxu0 0.0
      %744 = vmatpush1.msra.mxu0 0.0
      %745 = vmatprep.subr.mxu0 0.0
      %746 = vmatpush1.msra.mxu0 0.0
      %747 = vmatprep.subr.mxu0 0.0
      %748 = vmatpush1.msra.mxu0 0.0
      %749 = vmatprep.subr.mxu0 0.0
      %750 = vmatpush1.msra.mxu0 0.0
      %751 = vmatprep.subr.mxu0 0.0
      %752 = vmatpush1.msra.mxu0 0.0
      %753 = vmatprep.subr.mxu0 0.0
      %754 = vmatpush1.msra.mxu0 0.0
      %755 = vmatprep.subr.mxu0 0.0
      %756 = vmatpush1.msra.mxu0 0.0
      %757 = vmatprep.subr.mxu0 0.0
      %758 = vmatpush1.msra.mxu0 0.0
      %759 = vmatprep.subr.mxu0 0.0
      %760 = vmatpush1.msra.mxu0 0.0
      %761 = vmatprep.subr.mxu0 0.0
      %762 = vmatpush1.msra.mxu0 0.0
      %763 = vmatprep.subr.mxu0 0.0
      %764 = vmatpush1.msra.mxu0 0.0
      %765 = vmatprep.subr.mxu0 0.0
      %766 = vmatpush1.msra.mxu0 0.0
      %767 = vmatprep.subr.mxu0 0.0
      %768 = vmatpush1.msra.mxu0 0.0
      %769 = vmatprep.subr.mxu0 0.0
      %770 = vmatpush1.msra.mxu0 0.0
      %771 = vmatprep.subr.mxu0 0.0
      %772 = vmatpush1.msra.mxu0 0.0
      %773 = vmatprep.subr.mxu0 0.0
      %774 = vmatpush1.msra.mxu0 0.0
      %775 = vmatprep.subr.mxu0 0.0
      %776 = vmatpush1.msra.mxu0 0.0
      %777 = vmatprep.subr.mxu0 0.0
      %778 = vmatpush1.msra.mxu0 0.0
      %779 = vmatprep.subr.mxu0 0.0
      %780 = vmatpush1.msra.mxu0 0.0
      %781 = vmatprep.subr.mxu0 0.0
      %782 = vmatpush1.msra.mxu0 0.0
      %783 = vmatprep.subr.mxu0 0.0
      %784 = vmatpush1.msra.mxu0 0.0
      %785 = vmatprep.subr.mxu0 0.0
      %786 = vmatpush1.msra.mxu0 0.0
      %787 = vmatprep.subr.mxu0 0.0
      %788 = vmatpush1.msra.mxu0 0.0
      %789 = vmatprep.subr.mxu0 0.0
      %790 = vmatpush1.msra.mxu0 0.0
      %791 = vmatprep.subr.mxu0 0.0
      %792 = vmatpush1.msra.mxu0 0.0
      %793 = vmatprep.subr.mxu0 0.0
      %794 = vmatpush1.msra.mxu0 0.0
      %795 = vmatprep.subr.mxu0 0.0
      %796 = vmatpush1.msra.mxu0 0.0
      %797 = vmatprep.subr.mxu0 0.0
      %798 = vmatpush1.msra.mxu0 0.0
      %799 = vmatprep.subr.mxu0 0.0
      %800 = vmatpush1.msra.mxu0 0.0
      %801 = vmatprep.mubr.f32.mxu0 0.0
      %802 = vmatmul.mubr.f32.gmra.mrb[0].mxu0 %v711
      %v803 = vpop.f32.mrb[0].mxu0
      %v804 = vadd.f32 0.0, %v803
      %v805 = vpop.f32.mrb[0].mxu0
      %806 = vmatprep.mubr.f32.mxu0 0.0
      %807 = vmatmul.mubr.f32.gmra.mrb[0].mxu0 %v714
      %v808 = vpop.f32.mrb[0].mxu0
      %v809 = vadd.f32 0.0, %v808
      %v810 = vpop.f32.mrb[0].mxu0
      %811 = vmatprep.mubr.f32.mxu0 0.0
      %812 = vmatmul.mubr.f32.gmra.mrb[0].mxu0 %v717
      %v813 = vpop.f32.mrb[0].mxu0
      %v814 = vadd.f32 0.0, %v813
      %v815 = vpop.f32.mrb[0].mxu0
      %816 = vmatprep.mubr.f32.mxu0 0.0
      %817 = vmatmul.mubr.f32.gmra.mrb[0].mxu0 %v720
      %v818 = vpop.f32.mrb[0].mxu0
      %v819 = vadd.f32 0.0, %v818
      %v820 = vpop.f32.mrb[0].mxu0
      %821 = vmatprep.mubr.f32.mxu0 0.0
      %822 = vmatmul.mubr.f32.gmra.mrb[0].mxu0 %v723
      %v823 = vpop.f32.mrb[0].mxu0
      %v824 = vadd.f32 0.0, %v823
      %v825 = vpop.f32.mrb[0].mxu0
      %826 = vmatprep.mubr.f32.mxu0 0.0
      %827 = vmatmul.mubr.f32.gmra.mrb[0].mxu0 %v726
      %v828 = vpop.f32.mrb[0].mxu0
      %v829 = vadd.f32 0.0, %v828
      %v830 = vpop.f32.mrb[0].mxu0
      %831 = vmatprep.mubr.f32.mxu0 0.0
      %832 = vmatmul.mubr.f32.gmra.mrb[0].mxu0 %v729
      %v833 = vpop.f32.mrb[0].mxu0
      %v834 = vadd.f32 0.0, %v833
      %v835 = vpop.f32.mrb[0].mxu0
      %836 = vmatprep.mubr.f32.mxu0 0.0
      %837 = vmatmul.mubr.f32.gmra.mrb[0].mxu0 %v732
      %v838 = vpop.f32.mrb[0].mxu0
      %v839 = vadd.f32 0.0, %v838
      %v840 = vpop.f32.mrb[0].mxu0
      %841 = vdwg.mxu0
      %v842 = vadd.f32 %v670, %v804
      %v843 = vadd.f32 %v675, %v809
      %v844 = vadd.f32 %v680, %v814
      %v845 = vadd.f32 %v685, %v819
      %v846 = vadd.f32 %v690, %v824
      %v847 = vadd.f32 %v695, %v829
      %v848 = vadd.f32 %v700, %v834
      %v849 = vadd.f32 %v705, %v839
      %v850 = vld [vmem:[%s2] sm:$0x1]
      %v852 = vlaneseq
      %v853 = vshrl.u32 %v852, 7
      %v854 = vsub.s32 0, %v853
      %v855 = vrot.slane %v850, %v854
      %v857 = vadd.f32 %v842, %v855
      %v858 = vadd.f32 %v843, %v855
      %v859 = vadd.f32 %v844, %v855
      %v860 = vadd.f32 %v845, %v855
      %v861 = vadd.f32 %v846, %v855
      %v862 = vadd.f32 %v847, %v855
      %v863 = vadd.f32 %v848, %v855
      %v864 = vadd.f32 %v849, %v855
      %v865 = vxor.u32 %v857, 2147483648
      %v866 = vxor.u32 %v858, 2147483648
      %v867 = vxor.u32 %v859, 2147483648
      %v868 = vxor.u32 %v860, 2147483648
      %v869 = vxor.u32 %v861, 2147483648
      %v870 = vxor.u32 %v862, 2147483648
      %v871 = vxor.u32 %v863, 2147483648
      %v872 = vxor.u32 %v864, 2147483648
      %v873 = vmul.f32 %v865, 1.442695
      %v874 = vpow.pop %v873
      %v875 = vmul.f32 %v866, 1.442695
      %v876 = vpow.pop %v875
      %v877 = vmul.f32 %v867, 1.442695
      %v878 = vpow.pop %v877
      %v879 = vmul.f32 %v868, 1.442695
      %v880 = vpow.pop %v879
      %v881 = vmul.f32 %v869, 1.442695
      %v882 = vpow.pop %v881
      %v883 = vmul.f32 %v870, 1.442695
      %v884 = vpow.pop %v883
      %v885 = vmul.f32 %v871, 1.442695
      %v886 = vpow.pop %v885
      %v887 = vmul.f32 %v872, 1.442695
      %v888 = vpow.pop %v887
      %v889 = vadd.f32 %v874, 1.0
      %v890 = vadd.f32 %v876, 1.0
      %v891 = vadd.f32 %v878, 1.0
      %v892 = vadd.f32 %v880, 1.0
      %v893 = vadd.f32 %v882, 1.0
      %v894 = vadd.f32 %v884, 1.0
      %v895 = vadd.f32 %v886, 1.0
      %v896 = vadd.f32 %v888, 1.0
      %v897 = vrcp.pop %v889
      %v898 = vmul.f32 1.0, %v897
      %v899 = vrcp.pop %v890
      %v900 = vmul.f32 1.0, %v899
      %v901 = vrcp.pop %v891
      %v902 = vmul.f32 1.0, %v901
      %v903 = vrcp.pop %v892
      %v904 = vmul.f32 1.0, %v903
      %v905 = vrcp.pop %v893
      %v906 = vmul.f32 1.0, %v905
      %v907 = vrcp.pop %v894
      %v908 = vmul.f32 1.0, %v907
      %v909 = vrcp.pop %v895
      %v910 = vmul.f32 1.0, %v909
      %v911 = vrcp.pop %v896
      %v912 = vmul.f32 1.0, %v911
      %v913 = vmul.f32 %v857, %v898
      %v914 = vmul.f32 %v858, %v900
      %v915 = vmul.f32 %v859, %v902
      %v916 = vmul.f32 %v860, %v904
      %v917 = vmul.f32 %v861, %v906
      %v918 = vmul.f32 %v862, %v908
      %v919 = vmul.f32 %v863, %v910
      %v920 = vmul.f32 %v864, %v912
      %v921 = vld [vmem:[%s3] sm:$0xff]
      %v922 = vld [vmem:[%s3 + $0x8] sm:$0xff]
      %v923 = vld [vmem:[%s4] sm:$0x1]
      %v925 = vlaneseq
      %v926 = vshrl.u32 %v925, 7
      %v927 = vsub.s32 0, %v926
      %v928 = vrot.slane %v923, %v927
      %vm930 = vcmask 130048
      %v932 = vsel %vm930, %v913, 0
      %v935 = vsel %vm930, %v914, 0
      %v938 = vsel %vm930, %v915, 0
      %v941 = vsel %vm930, %v916, 0
      %v944 = vsel %vm930, %v917, 0
      %v947 = vsel %vm930, %v918, 0
      %v950 = vsel %vm930, %v919, 0
      %v953 = vsel %vm930, %v920, 0
      %955 = vmatprep.subr.mxu0 0.0
      %956 = vmatpush1.msra.mxu0 %v921
      %957 = vmatprep.subr.mxu0 0.0
      %958 = vmatpush1.msra.mxu0 %v922
      %959 = vmatprep.subr.mxu0 0.0
      %960 = vmatpush1.msra.mxu0 0.0
      %961 = vmatprep.subr.mxu0 0.0
      %962 = vmatpush1.msra.mxu0 0.0
      %963 = vmatprep.subr.mxu0 0.0
      %964 = vmatpush1.msra.mxu0 0.0
      %965 = vmatprep.subr.mxu0 0.0
      %966 = vmatpush1.msra.mxu0 0.0
      %967 = vmatprep.subr.mxu0 0.0
      %968 = vmatpush1.msra.mxu0 0.0
      %969 = vmatprep.subr.mxu0 0.0
      %970 = vmatpush1.msra.mxu0 0.0
      %971 = vmatprep.subr.mxu0 0.0
      %972 = vmatpush1.msra.mxu0 0.0
      %973 = vmatprep.subr.mxu0 0.0
      %974 = vmatpush1.msra.mxu0 0.0
      %975 = vmatprep.subr.mxu0 0.0
      %976 = vmatpush1.msra.mxu0 0.0
      %977 = vmatprep.subr.mxu0 0.0
      %978 = vmatpush1.msra.mxu0 0.0
      %979 = vmatprep.subr.mxu0 0.0
      %980 = vmatpush1.msra.mxu0 0.0
      %981 = vmatprep.subr.mxu0 0.0
      %982 = vmatpush1.msra.mxu0 0.0
      %983 = vmatprep.subr.mxu0 0.0
      %984 = vmatpush1.msra.mxu0 0.0
      %985 = vmatprep.subr.mxu0 0.0
      %986 = vmatpush1.msra.mxu0 0.0
      %987 = vmatprep.subr.mxu0 0.0
      %988 = vmatpush1.msra.mxu0 0.0
      %989 = vmatprep.subr.mxu0 0.0
      %990 = vmatpush1.msra.mxu0 0.0
      %991 = vmatprep.subr.mxu0 0.0
      %992 = vmatpush1.msra.mxu0 0.0
      %993 = vmatprep.subr.mxu0 0.0
      %994 = vmatpush1.msra.mxu0 0.0
      %995 = vmatprep.subr.mxu0 0.0
      %996 = vmatpush1.msra.mxu0 0.0
      %997 = vmatprep.subr.mxu0 0.0
      %998 = vmatpush1.msra.mxu0 0.0
      %999 = vmatprep.subr.mxu0 0.0
      %1000 = vmatpush1.msra.mxu0 0.0
      %1001 = vmatprep.subr.mxu0 0.0
      %1002 = vmatpush1.msra.mxu0 0.0
      %1003 = vmatprep.subr.mxu0 0.0
      %1004 = vmatpush1.msra.mxu0 0.0
      %1005 = vmatprep.subr.mxu0 0.0
      %1006 = vmatpush1.msra.mxu0 0.0
      %1007 = vmatprep.subr.mxu0 0.0
      %1008 = vmatpush1.msra.mxu0 0.0
      %1009 = vmatprep.subr.mxu0 0.0
      %1010 = vmatpush1.msra.mxu0 0.0
      %1011 = vmatprep.subr.mxu0 0.0
      %1012 = vmatpush1.msra.mxu0 0.0
      %1013 = vmatprep.subr.mxu0 0.0
      %1014 = vmatpush1.msra.mxu0 0.0
      %1015 = vmatprep.subr.mxu0 0.0
      %1016 = vmatpush1.msra.mxu0 0.0
      %1017 = vmatprep.subr.mxu0 0.0
      %1018 = vmatpush1.msra.mxu0 0.0
      %1019 = vmatprep.mubr.f32.mxu0 0.0
      %1020 = vmatmul.mubr.f32.gmra.mrb[0].mxu0 %v932
      %v1021 = vpop.f32.mrb[0].mxu0
      %v1022 = vadd.f32 %v928, %v1021
      %v1023 = vpop.f32.mrb[0].mxu0
      %1024 = vmatprep.mubr.f32.mxu0 0.0
      %1025 = vmatmul.mubr.f32.gmra.mrb[0].mxu0 %v935
      %v1026 = vpop.f32.mrb[0].mxu0
      %v1027 = vadd.f32 %v928, %v1026
      %v1028 = vpop.f32.mrb[0].mxu0
      %1029 = vmatprep.mubr.f32.mxu0 0.0
      %1030 = vmatmul.mubr.f32.gmra.mrb[0].mxu0 %v938
      %v1031 = vpop.f32.mrb[0].mxu0
      %v1032 = vadd.f32 %v928, %v1031
      %v1033 = vpop.f32.mrb[0].mxu0
      %1034 = vmatprep.mubr.f32.mxu0 0.0
      %1035 = vmatmul.mubr.f32.gmra.mrb[0].mxu0 %v941
      %v1036 = vpop.f32.mrb[0].mxu0
      %v1037 = vadd.f32 %v928, %v1036
      %v1038 = vpop.f32.mrb[0].mxu0
      %1039 = vmatprep.mubr.f32.mxu0 0.0
      %1040 = vmatmul.mubr.f32.gmra.mrb[0].mxu0 %v944
      %v1041 = vpop.f32.mrb[0].mxu0
      %v1042 = vadd.f32 %v928, %v1041
      %v1043 = vpop.f32.mrb[0].mxu0
      %1044 = vmatprep.mubr.f32.mxu0 0.0
      %1045 = vmatmul.mubr.f32.gmra.mrb[0].mxu0 %v947
      %v1046 = vpop.f32.mrb[0].mxu0
      %v1047 = vadd.f32 %v928, %v1046
      %v1048 = vpop.f32.mrb[0].mxu0
      %1049 = vmatprep.mubr.f32.mxu0 0.0
      %1050 = vmatmul.mubr.f32.gmra.mrb[0].mxu0 %v950
      %v1051 = vpop.f32.mrb[0].mxu0
      %v1052 = vadd.f32 %v928, %v1051
      %v1053 = vpop.f32.mrb[0].mxu0
      %1054 = vmatprep.mubr.f32.mxu0 0.0
      %1055 = vmatmul.mubr.f32.gmra.mrb[0].mxu0 %v953
      %v1056 = vpop.f32.mrb[0].mxu0
      %v1057 = vadd.f32 %v928, %v1056
      %v1058 = vpop.f32.mrb[0].mxu0
      %1059 = vdwg.mxu0
      %v1060 = vadd.f32 %v228, %v1022
      %v1061 = vadd.f32 %v229, %v1027
      %v1062 = vadd.f32 %v230, %v1032
      %v1063 = vadd.f32 %v231, %v1037
      %v1064 = vadd.f32 %v232, %v1042
      %v1065 = vadd.f32 %v233, %v1047
      %v1066 = vadd.f32 %v234, %v1052
      %v1067 = vadd.f32 %v235, %v1057
      %1068 = vst.msk [vmem:[%s226] sm:$0xff] %vm442, %v1060
      %1069 = vst.msk [vmem:[%s226 + $0x8] sm:$0xff] %vm442, %v1061
      %1070 = vst.msk [vmem:[%s226 + $0x10] sm:$0xff] %vm442, %v1062
      %1071 = vst.msk [vmem:[%s226 + $0x18] sm:$0xff] %vm442, %v1063
      %1072 = vst.msk [vmem:[%s226 + $0x20] sm:$0xff] %vm442, %v1064
      %1073 = vst.msk [vmem:[%s226 + $0x28] sm:$0xff] %vm442, %v1065
      %1074 = vst.msk [vmem:[%s226 + $0x30] sm:$0xff] %vm442, %v1066
      %1075 = vst.msk [vmem:[%s226 + $0x38] sm:$0xff] %vm442, %v1067
      %s1076 = smul.u32 8, %s16
      %p1077 = scmp.lt.s32.totalorder %s1076, 31
      %s1078 = scalar_select %p1077, %s1076, 31
      %s1079 = smul.addr %s1078, 8
      %s1080 = scalar_lea.vmem %s5, %s1079
      // Predicated region
      $region41: #{tpu_custom_call.1} parent=39 // pred_check
        %p1081 = pneg %p144
      $region42: #{tpu_custom_call.1} parent=39 // pred_check_branch
        %1083 = sbr.rel (%p1081) target = $region44
      $region43: #{tpu_custom_call.1} parent=39 // pred_region
        %s1084 = smul.u32 8, %s16
      $region44: #{tpu_custom_call.1} parent=39 // pred_fallthru
        _
    $region40: #{tpu_custom_call.1} parent=5 // pred_fallthru
      _
    %p1085 = scmp.le.s32.totalorder 2, %s11
    // Predicated region
    $region45: #{tpu_custom_call.1} parent=5 // pred_check
      %p1086 = pneg %p1085
    $region46: #{tpu_custom_call.1} parent=5 // pred_check_branch
      %1088 = sbr.rel (%p1086) target = $region48
    $region47: #{tpu_custom_call.1} parent=5 // pred_region
      %s1089 = ssub.s32 %s11, 2
      // Predicated region
      $region49: #{tpu_custom_call.1} parent=47 // pred_check
        %p1090 = pneg %p150
      $region50: #{tpu_custom_call.1} parent=47 // pred_check_branch
        %1092 = sbr.rel (%p1090) target = $region52
      $region51: #{tpu_custom_call.1} parent=47 // pred_region
        %s1093 = smul.u32 8, %s17
        %p1094 = scmp.lt.s32.totalorder %s1093, 31
        %s1095 = scalar_select %p1094, %s1093, 31
        %s1096 = smul.addr %s1095, 8
        %s1097 = scalar_lea.vmem %s5, %s1096
      $region52: #{tpu_custom_call.1} parent=47 // pred_fallthru
        _
    $region48: #{tpu_custom_call.1} parent=5 // pred_fallthru
      _
  $region6: #{tpu_custom_call.1} parent=0 // loop_footer
    %s15 = sadd.s32 1, %s11
  $region7: #{tpu_custom_call.1} parent=0 // loop_footer_branch
    %10 = sbr.rel target = $region3
  $region8: #{tpu_custom_call.1} parent=0 // loop_exit
    _

// kernel: tpu_custom_call.1
$region0: #{tpu_custom_call.1}
  #allocation0 [shape = 'u32[]', space=smem, size = 0x4, offset = 0x4, fixed_abs, tag = 'smem constant byte address 0x4 - core index']
  #allocation1 [shape = 'u32[144,128]{1,0:T(1,128)}', space=vmem, size = 0x12000, scoped, tag = 'internal scratch']
  %s0 = inlined_call_operand.vmem [shape: f32[256,4], index: 0, kind: input, shape index: {}]
  %s1 = inlined_call_operand.vmem [shape: f32[3,4,16], index: 1, kind: input, shape index: {}]
  %s2 = inlined_call_operand.vmem [shape: f32[1,16], index: 2, kind: input, shape index: {}]
  %s3 = inlined_call_operand.vmem [shape: f32[16,4], index: 3, kind: input, shape index: {}]
  %s4 = inlined_call_operand.vmem [shape: f32[1,4], index: 4, kind: input, shape index: {}]
  %s5 = inlined_call_operand.vmem [shape: f32[256,4], index: 5, kind: output, shape index: {}]
  %s6 = sld [smem:[#allocation0]]
  $region53: #{tpu_custom_call.1} parent=0
    _
  %s8 = ssub.s32 1, %s6
  %s9 = scalar_select 0, %s8, %s6
  loop: start=0, step=1, limit=6
  $region2: #{tpu_custom_call.1} parent=0 // loop_pre_header
    _
  $region3: #{tpu_custom_call.1} parent=0 // loop_header
    %s11 = sphi 0, %s15
    %p12 = scmp.ge.s32.totalorder %s11, 6
    %s21 = sphi 0, %s23
    %s24 = sphi 0, %s21
    %s25 = sphi 0, %s24
    %s41 = sphi 0, %s25
    %s45 = sphi 0, %s45
    %s47 = sphi 0, %s45
    %s48 = sphi 0, %s47
    %s62 = sphi 0, %s48
    %s66 = sphi 0, %s66
    %s68 = sphi 0, %s66
    %s69 = sphi 0, %s68
    %s83 = sphi 0, %s69
    %s87 = sphi 0, %s87
    %s89 = sphi 0, %s87
    %s90 = sphi 0, %s89
    %s104 = sphi 0, %s90
    %s108 = sphi 0, %s108
    %s110 = sphi 0, %s108
    %s111 = sphi 0, %s110
    %s125 = sphi 0, %s111
    %s131 = sphi 0, %s133
    %s134 = sphi 0, %s131
    %s135 = sphi 0, %s134
    %s151 = sphi 0, %s135
  $region4: #{tpu_custom_call.1} parent=0 // loop_header_branch
    %14 = sbr.rel (%p12) target = $region8
  $region5: #{tpu_custom_call.1} parent=0 // loop_body
    %s16 = ssub.s32 %s11, 1
    %s17 = ssub.s32 %s11, 2
    %s18 = sadd.s32 %s11, 1
    %s19 = ssub.s32 %s11, %s18
    %p20 = scmp.eq.s32.totalorder %s19, 0
    %s22 = sadd.s32 %s21, 1
    %s23 = scalar_select %p20, %s21, %s22
    %p26 = pneg %p20
    %p27 = scmp.eq.s32.totalorder %s11, 3
    %p28 = por %p26, %p27
    %p29 = scmp.ne.s32.totalorder %s21, %s24
    %p30 = scmp.eq.s32.totalorder %s11, 0
    %p31 = por %p29, %p30
    %p32 = scmp.ne.s32.totalorder %s21, %s24
    %p33 = scmp.eq.s32.totalorder %s16, 3
    %p34 = por %p32, %p33
    %p35 = scmp.ne.s32.totalorder %s24, %s25
    %p36 = scmp.eq.s32.totalorder %s16, 0
    %p37 = por %p35, %p36
    %p38 = scmp.ne.s32.totalorder %s24, %s25
    %p39 = scmp.eq.s32.totalorder %s17, 3
    %p40 = por %p38, %p39
    %p42 = scmp.ne.s32.totalorder %s25, %s41
    %p43 = scmp.eq.s32.totalorder %s17, 0
    %p44 = por %p42, %p43
    %s46 = sadd.s32 %s45, 1
    %p49 = scmp.eq.s32.totalorder %s11, 3
    %p50 = scmp.ne.s32.totalorder %s45, %s47
    %p51 = scmp.eq.s32.totalorder %s11, 0
    %p52 = por %p50, %p51
    %p53 = scmp.ne.s32.totalorder %s45, %s47
    %p54 = scmp.eq.s32.totalorder %s16, 3
    %p55 = por %p53, %p54
    %p56 = scmp.ne.s32.totalorder %s47, %s48
    %p57 = scmp.eq.s32.totalorder %s16, 0
    %p58 = por %p56, %p57
    %p59 = scmp.ne.s32.totalorder %s47, %s48
    %p60 = scmp.eq.s32.totalorder %s17, 3
    %p61 = por %p59, %p60
    %p63 = scmp.ne.s32.totalorder %s48, %s62
    %p64 = scmp.eq.s32.totalorder %s17, 0
    %p65 = por %p63, %p64
    %s67 = sadd.s32 %s66, 1
    %p70 = scmp.eq.s32.totalorder %s11, 3
    %p71 = scmp.ne.s32.totalorder %s66, %s68
    %p72 = scmp.eq.s32.totalorder %s11, 0
    %p73 = por %p71, %p72
    %p74 = scmp.ne.s32.totalorder %s66, %s68
    %p75 = scmp.eq.s32.totalorder %s16, 3
    %p76 = por %p74, %p75
    %p77 = scmp.ne.s32.totalorder %s68, %s69
    %p78 = scmp.eq.s32.totalorder %s16, 0
    %p79 = por %p77, %p78
    %p80 = scmp.ne.s32.totalorder %s68, %s69
    %p81 = scmp.eq.s32.totalorder %s17, 3
    %p82 = por %p80, %p81
    %p84 = scmp.ne.s32.totalorder %s69, %s83
    %p85 = scmp.eq.s32.totalorder %s17, 0
    %p86 = por %p84, %p85
    %s88 = sadd.s32 %s87, 1
    %p91 = scmp.eq.s32.totalorder %s11, 3
    %p92 = scmp.ne.s32.totalorder %s87, %s89
    %p93 = scmp.eq.s32.totalorder %s11, 0
    %p94 = por %p92, %p93
    %p95 = scmp.ne.s32.totalorder %s87, %s89
    %p96 = scmp.eq.s32.totalorder %s16, 3
    %p97 = por %p95, %p96
    %p98 = scmp.ne.s32.totalorder %s89, %s90
    %p99 = scmp.eq.s32.totalorder %s16, 0
    %p100 = por %p98, %p99
    %p101 = scmp.ne.s32.totalorder %s89, %s90
    %p102 = scmp.eq.s32.totalorder %s17, 3
    %p103 = por %p101, %p102
    %p105 = scmp.ne.s32.totalorder %s90, %s104
    %p106 = scmp.eq.s32.totalorder %s17, 0
    %p107 = por %p105, %p106
    %s109 = sadd.s32 %s108, 1
    %p112 = scmp.eq.s32.totalorder %s11, 3
    %p113 = scmp.ne.s32.totalorder %s108, %s110
    %p114 = scmp.eq.s32.totalorder %s11, 0
    %p115 = por %p113, %p114
    %p116 = scmp.ne.s32.totalorder %s108, %s110
    %p117 = scmp.eq.s32.totalorder %s16, 3
    %p118 = por %p116, %p117
    %p119 = scmp.ne.s32.totalorder %s110, %s111
    %p120 = scmp.eq.s32.totalorder %s16, 0
    %p121 = por %p119, %p120
    %p122 = scmp.ne.s32.totalorder %s110, %s111
    %p123 = scmp.eq.s32.totalorder %s17, 3
    %p124 = por %p122, %p123
    %p126 = scmp.ne.s32.totalorder %s111, %s125
    %p127 = scmp.eq.s32.totalorder %s17, 0
    %p128 = por %p126, %p127
    %s129 = ssub.s32 %s11, %s18
    %p130 = scmp.eq.s32.totalorder %s129, 0
    %s132 = sadd.s32 %s131, 1
    %s133 = scalar_select %p130, %s131, %s132
    %p136 = pneg %p130
    %p137 = scmp.eq.s32.totalorder %s11, 3
    %p138 = por %p136, %p137
    %p139 = scmp.ne.s32.totalorder %s131, %s134
    %p140 = scmp.eq.s32.totalorder %s11, 0
    %p141 = por %p139, %p140
    %p142 = scmp.ne.s32.totalorder %s131, %s134
    %p143 = scmp.eq.s32.totalorder %s16, 3
    %p144 = por %p142, %p143
    %p145 = scmp.ne.s32.totalorder %s134, %s135
    %p146 = scmp.eq.s32.totalorder %s16, 0
    %p147 = por %p145, %p146
    %p148 = scmp.ne.s32.totalorder %s134, %s135
    %p149 = scmp.eq.s32.totalorder %s17, 3
    %p150 = por %p148, %p149
    %p152 = scmp.ne.s32.totalorder %s135, %s151
    %p153 = scmp.eq.s32.totalorder %s17, 0
    %p154 = por %p152, %p153
    %p155 = scmp.le.s32.totalorder 1, %s11
    %p156 = scmp.lt.s32.totalorder %s11, 5
    %p157 = pnand %p155, %p156
    %p158 = pneg %p157
    // Predicated region
    $region9: #{tpu_custom_call.1} parent=5 // pred_check
      _
    $region10: #{tpu_custom_call.1} parent=5 // pred_check_branch
      %160 = sbr.rel (%p157) target = $region12
    $region11: #{tpu_custom_call.1} parent=5 // pred_region
      %s161 = ssub.s32 %s11, 1
      // Predicated region
      $region13: #{tpu_custom_call.1} parent=11 // pred_check
        %p162 = pneg %p58
      $region14: #{tpu_custom_call.1} parent=11 // pred_check_branch
        %164 = sbr.rel (%p162) target = $region16
      $region15: #{tpu_custom_call.1} parent=11 // pred_region
        _
      $region16: #{tpu_custom_call.1} parent=11 // pred_fallthru
        _
      // Predicated region
      $region17: #{tpu_custom_call.1} parent=11 // pred_check
        %p165 = pneg %p79
      $region18: #{tpu_custom_call.1} parent=11 // pred_check_branch
        %167 = sbr.rel (%p165) target = $region20
      $region19: #{tpu_custom_call.1} parent=11 // pred_region
        _
      $region20: #{tpu_custom_call.1} parent=11 // pred_fallthru
        _
      // Predicated region
      $region21: #{tpu_custom_call.1} parent=11 // pred_check
        %p168 = pneg %p100
      $region22: #{tpu_custom_call.1} parent=11 // pred_check_branch
        %170 = sbr.rel (%p168) target = $region24
      $region23: #{tpu_custom_call.1} parent=11 // pred_region
        _
      $region24: #{tpu_custom_call.1} parent=11 // pred_fallthru
        _
      // Predicated region
      $region25: #{tpu_custom_call.1} parent=11 // pred_check
        %p171 = pneg %p121
      $region26: #{tpu_custom_call.1} parent=11 // pred_check_branch
        %173 = sbr.rel (%p171) target = $region28
      $region27: #{tpu_custom_call.1} parent=11 // pred_region
        _
      $region28: #{tpu_custom_call.1} parent=11 // pred_fallthru
        _
    $region12: #{tpu_custom_call.1} parent=5 // pred_fallthru
      _
    %p174 = scmp.lt.s32.totalorder %s11, 4
    // Predicated region
    $region29: #{tpu_custom_call.1} parent=5 // pred_check
      %p175 = pneg %p174
    $region30: #{tpu_custom_call.1} parent=5 // pred_check_branch
      %177 = sbr.rel (%p175) target = $region32
    $region31: #{tpu_custom_call.1} parent=5 // pred_region
      // Predicated region
      $region33: #{tpu_custom_call.1} parent=31 // pred_check
        %p178 = pneg %p31
      $region34: #{tpu_custom_call.1} parent=31 // pred_check_branch
        %180 = sbr.rel (%p178) target = $region36
      $region35: #{tpu_custom_call.1} parent=31 // pred_region
        %s181 = smul.u32 8, %s11
        %p182 = scmp.lt.s32.totalorder %s181, 31
        %s183 = scalar_select %p182, %s181, 31
        %s184 = smul.addr %s183, 8
        %s185 = scalar_lea.vmem %s0, %s184
        %s186 = smul.u32 8, %s11
      $region36: #{tpu_custom_call.1} parent=31 // pred_fallthru
        _
    $region32: #{tpu_custom_call.1} parent=5 // pred_fallthru
      _
    %p187 = scmp.le.s32.totalorder 1, %s11
    %p188 = scmp.lt.s32.totalorder %s11, 5
    %p189 = pnand %p187, %p188
    %p190 = pneg %p189
    // Predicated region
    $region37: #{tpu_custom_call.1} parent=5 // pred_check
      _
    $region38: #{tpu_custom_call.1} parent=5 // pred_check_branch
      %192 = sbr.rel (%p189) target = $region40
    $region39: #{tpu_custom_call.1} parent=5 // pred_region
      %s193 = ssub.s32 %s11, 1
      %s194 = smul.u32 8, %s16
      %p195 = scmp.lt.s32.totalorder %s194, 31
      %s196 = scalar_select %p195, %s194, 31
      %s197 = smul.addr %s196, 8
      %s198 = scalar_lea.vmem %s0, %s197
      %p199 = pneg %p37
      %p200 = pneg %p34
      %p201 = pneg %p58
      %p202 = pneg %p55
      %p203 = pneg %p79
      %p204 = pneg %p76
      %p205 = pneg %p100
      %p206 = pneg %p97
      %p207 = pneg %p121
      %p208 = pneg %p118
      %p209 = pneg %p147
      %p210 = pneg %p144
      %s211 = smul.u32 8, %s16
      %p212 = scmp.lt.s32.totalorder %s211, 31
      %s213 = scalar_select %p212, %s211, 31
      %s214 = smul.addr %s213, 8
      %s215 = scalar_lea.vmem %s5, %s214
      %s216 = smul.u32 8, %s16
      %p217 = scmp.lt.s32.totalorder %s216, 31
      %s218 = scalar_select %p217, %s216, 31
      %s219 = smul.addr %s218, 8
      %s220 = scalar_lea.vmem %s0, %s219
      %s221 = smul.u32 8, %s16
      %s222 = smul.u32 8, %s16
      %p223 = scmp.lt.s32.totalorder %s222, 31
      %s224 = scalar_select %p223, %s222, 31
      %s225 = smul.addr %s224, 8
      %s226 = scalar_lea.vmem %s5, %s225
      %s227 = smul.u32 8, %s16
      %v228 = vld [vmem:[%s220] sm:$0xff]
      %v229 = vld [vmem:[%s220 + $0x8] sm:$0xff]
      %v230 = vld [vmem:[%s220 + $0x10] sm:$0xff]
      %v231 = vld [vmem:[%s220 + $0x18] sm:$0xff]
      %v232 = vld [vmem:[%s220 + $0x20] sm:$0xff]
      %v233 = vld [vmem:[%s220 + $0x28] sm:$0xff]
      %v234 = vld [vmem:[%s220 + $0x30] sm:$0xff]
      %v235 = vld [vmem:[%s220 + $0x38] sm:$0xff]
      %v236 = vlaneseq
      %v237 = vshrl.u32 %v236, 7
      %v238 = vadd.s32 %v237, 8
      %v239 = vadd.s32 %v237, 16
      %v240 = vadd.s32 %v237, 24
      %v241 = vadd.s32 %v237, 32
      %v242 = vadd.s32 %v237, 40
      %v243 = vadd.s32 %v237, 48
      %v244 = vadd.s32 %v237, 56
      %vm245 = vcmp.lt.s32.totalorder %v237, 0
      %v246 = vsub.s32 0, %v237
      %v247 = vsel %vm245, %v246, %v237
      %v248 = vshrl.u32 %v247, 3
      %v249 = vand.u32 %v247, 7
      %v250 = vsub.s32 0, %v249
      %v251 = vsel %vm245, %v250, %v249
      %vm252 = vcmp.lt.s32.totalorder %v238, 0
      %v253 = vsub.s32 0, %v238
      %v254 = vsel %vm252, %v253, %v238
      %v255 = vshrl.u32 %v254, 3
      %v256 = vand.u32 %v254, 7
      %v257 = vsub.s32 0, %v256
      %v258 = vsel %vm252, %v257, %v256
      %vm259 = vcmp.lt.s32.totalorder %v239, 0
      %v260 = vsub.s32 0, %v239
      %v261 = vsel %vm259, %v260, %v239
      %v262 = vshrl.u32 %v261, 3
      %v263 = vand.u32 %v261, 7
      %v264 = vsub.s32 0, %v263
      %v265 = vsel %vm259, %v264, %v263
      %vm266 = vcmp.lt.s32.totalorder %v240, 0
      %v267 = vsub.s32 0, %v240
      %v268 = vsel %vm266, %v267, %v240
      %v269 = vshrl.u32 %v268, 3
      %v270 = vand.u32 %v268, 7
      %v271 = vsub.s32 0, %v270
      %v272 = vsel %vm266, %v271, %v270
      %vm273 = vcmp.lt.s32.totalorder %v241, 0
      %v274 = vsub.s32 0, %v241
      %v275 = vsel %vm273, %v274, %v241
      %v276 = vshrl.u32 %v275, 3
      %v277 = vand.u32 %v275, 7
      %v278 = vsub.s32 0, %v277
      %v279 = vsel %vm273, %v278, %v277
      %vm280 = vcmp.lt.s32.totalorder %v242, 0
      %v281 = vsub.s32 0, %v242
      %v282 = vsel %vm280, %v281, %v242
      %v283 = vshrl.u32 %v282, 3
      %v284 = vand.u32 %v282, 7
      %v285 = vsub.s32 0, %v284
      %v286 = vsel %vm280, %v285, %v284
      %vm287 = vcmp.lt.s32.totalorder %v243, 0
      %v288 = vsub.s32 0, %v243
      %v289 = vsel %vm287, %v288, %v243
      %v290 = vshrl.u32 %v289, 3
      %v291 = vand.u32 %v289, 7
      %v292 = vsub.s32 0, %v291
      %v293 = vsel %vm287, %v292, %v291
      %vm294 = vcmp.lt.s32.totalorder %v244, 0
      %v295 = vsub.s32 0, %v244
      %v296 = vsel %vm294, %v295, %v244
      %v297 = vshrl.u32 %v296, 3
      %v298 = vand.u32 %v296, 7
      %v299 = vsub.s32 0, %v298
      %v300 = vsel %vm294, %v299, %v298
      %vm301 = vcmp.ne.s32.totalorder %v251, 0
      %vm302 = vcmp.ne.s32.totalorder %v258, 0
      %vm303 = vcmp.ne.s32.totalorder %v265, 0
      %vm304 = vcmp.ne.s32.totalorder %v272, 0
      %vm305 = vcmp.ne.s32.totalorder %v279, 0
      %vm306 = vcmp.ne.s32.totalorder %v286, 0
      %vm307 = vcmp.ne.s32.totalorder %v293, 0
      %vm308 = vcmp.ne.s32.totalorder %v300, 0
      %vm309 = vcmp.lt.s32.totalorder %v251, 0
      %vm310 = vcmp.lt.s32.totalorder %v258, 0
      %vm311 = vcmp.lt.s32.totalorder %v265, 0
      %vm312 = vcmp.lt.s32.totalorder %v272, 0
      %vm313 = vcmp.lt.s32.totalorder %v279, 0
      %vm314 = vcmp.lt.s32.totalorder %v286, 0
      %vm315 = vcmp.lt.s32.totalorder %v293, 0
      %vm316 = vcmp.lt.s32.totalorder %v300, 0
      %vm317 = vmand %vm309, %vm301
      %vm318 = vmand %vm310, %vm302
      %vm319 = vmand %vm311, %vm303
      %vm320 = vmand %vm312, %vm304
      %vm321 = vmand %vm313, %vm305
      %vm322 = vmand %vm314, %vm306
      %vm323 = vmand %vm315, %vm307
      %vm324 = vmand %vm316, %vm308
      %v325 = vadd.s32 %v251, 8
      %v326 = vadd.s32 %v258, 8
      %v327 = vadd.s32 %v265, 8
      %v328 = vadd.s32 %v272, 8
      %v329 = vadd.s32 %v279, 8
      %v330 = vadd.s32 %v286, 8
      %v331 = vadd.s32 %v293, 8
      %v332 = vadd.s32 %v300, 8
      %v333 = vsel %vm317, %v325, %v251
      %v334 = vsel %vm318, %v326, %v258
      %v335 = vsel %vm319, %v327, %v265
      %v336 = vsel %vm320, %v328, %v272
      %v337 = vsel %vm321, %v329, %v279
      %v338 = vsel %vm322, %v330, %v286
      %v339 = vsel %vm323, %v331, %v293
      %v340 = vsel %vm324, %v332, %v300
      %vm341 = vcmp.eq.s32.totalorder %v333, 0
      %vm342 = vcmp.eq.s32.totalorder %v334, 0
      %vm343 = vcmp.eq.s32.totalorder %v335, 0
      %vm344 = vcmp.eq.s32.totalorder %v336, 0
      %vm345 = vcmp.eq.s32.totalorder %v337, 0
      %vm346 = vcmp.eq.s32.totalorder %v338, 0
      %vm347 = vcmp.eq.s32.totalorder %v339, 0
      %vm348 = vcmp.eq.s32.totalorder %v340, 0
      %v349 = vrot.slane %v228, 7
      %v350 = vrot.slane %v229, 7
      %v351 = vrot.slane %v230, 7
      %v352 = vrot.slane %v231, 7
      %v353 = vrot.slane %v232, 7
      %v354 = vrot.slane %v233, 7
      %v355 = vrot.slane %v234, 7
      %v356 = vrot.slane %v235, 7
      %vm357 = vcmp.lt.s32.totalorder %v237, 1
      %v358 = vsel %vm357, %v355, %v356
      %v359 = vsel %vm357, %v354, %v355
      %v360 = vsel %vm357, %v353, %v354
      %v361 = vsel %vm357, %v352, %v353
      %v362 = vsel %vm357, %v351, %v352
      %v363 = vsel %vm357, %v350, %v351
      %v364 = vsel %vm357, %v349, %v350
      %v365 = vsel %vm357, %v356, %v349
      %v366 = vsel %vm341, 1, 0
      %v367 = vsel %vm342, 1, 0
      %v368 = vsel %vm343, 1, 0
      %v369 = vsel %vm344, 1, 0
      %v370 = vsel %vm345, 1, 0
      %v371 = vsel %vm346, 1, 0
      %v372 = vsel %vm347, 1, 0
      %v373 = vsel %vm348, 1, 0
      %vm374 = vcmp.eq.s32.totalorder %v366, 1
      %vm375 = vcmp.eq.s32.totalorder %v367, 1
      %vm376 = vcmp.eq.s32.totalorder %v368, 1
      %vm377 = vcmp.eq.s32.totalorder %v369, 1
      %vm378 = vcmp.eq.s32.totalorder %v370, 1
      %vm379 = vcmp.eq.s32.totalorder %v371, 1
      %vm380 = vcmp.eq.s32.totalorder %v372, 1
      %vm381 = vcmp.eq.s32.totalorder %v373, 1
      %v382 = vsel %vm374, 0.0, %v365
      %v383 = vsel %vm375, 0.0, %v364
      %v384 = vsel %vm376, 0.0, %v363
      %v385 = vsel %vm377, 0.0, %v362
      %v386 = vsel %vm378, 0.0, %v361
      %v387 = vsel %vm379, 0.0, %v360
      %v388 = vsel %vm380, 0.0, %v359
      %v389 = vsel %vm381, 0.0, %v358
      %vm390 = vcmp.eq.s32.totalorder %v333, 7
      %vm391 = vcmp.eq.s32.totalorder %v334, 7
      %vm392 = vcmp.eq.s32.totalorder %v335, 7
      %vm393 = vcmp.eq.s32.totalorder %v336, 7
      %vm394 = vcmp.eq.s32.totalorder %v337, 7
      %vm395 = vcmp.eq.s32.totalorder %v338, 7
      %vm396 = vcmp.eq.s32.totalorder %v339, 7
      %vm397 = vcmp.eq.s32.totalorder %v340, 7
      %v398 = vrot.slane %v228, 1
      %v399 = vrot.slane %v229, 1
      %v400 = vrot.slane %v230, 1
      %v401 = vrot.slane %v231, 1
      %v402 = vrot.slane %v232, 1
      %v403 = vrot.slane %v233, 1
      %v404 = vrot.slane %v234, 1
      %v405 = vrot.slane %v235, 1
      %vm406 = vcmp.lt.s32.totalorder %v237, 7
      %v407 = vsel %vm406, %v404, %v405
      %v408 = vsel %vm406, %v403, %v404
      %v409 = vsel %vm406, %v402, %v403
      %v410 = vsel %vm406, %v401, %v402
      %v411 = vsel %vm406, %v400, %v401
      %v412 = vsel %vm406, %v399, %v400
      %v413 = vsel %vm406, %v398, %v399
      %v414 = vsel %vm406, %v405, %v398
      %v415 = vsel %vm390, 1, 0
      %v416 = vsel %vm391, 1, 0
      %v417 = vsel %vm392, 1, 0
      %v418 = vsel %vm393, 1, 0
      %v419 = vsel %vm394, 1, 0
      %v420 = vsel %vm395, 1, 0
      %v421 = vsel %vm396, 1, 0
      %v422 = vsel %vm397, 1, 0
      %vm423 = vcmp.eq.s32.totalorder %v415, 1
      %vm424 = vcmp.eq.s32.totalorder %v416, 1
      %vm425 = vcmp.eq.s32.totalorder %v417, 1
      %vm426 = vcmp.eq.s32.totalorder %v418, 1
      %vm427 = vcmp.eq.s32.totalorder %v419, 1
      %vm428 = vcmp.eq.s32.totalorder %v420, 1
      %vm429 = vcmp.eq.s32.totalorder %v421, 1
      %vm430 = vcmp.eq.s32.totalorder %v422, 1
      %v431 = vsel %vm423, 0.0, %v413
      %v432 = vsel %vm424, 0.0, %v412
      %v433 = vsel %vm425, 0.0, %v411
      %v434 = vsel %vm426, 0.0, %v410
      %v435 = vsel %vm427, 0.0, %v409
      %v436 = vsel %vm428, 0.0, %v408
      %v437 = vsel %vm429, 0.0, %v407
      %v438 = vsel %vm430, 0.0, %v414
      %s439 = scalar_lea.vmem %s1, 4
      %v440 = vld [vmem:[%s439] sm:$0xf]
      %v441 = vld [vmem:[%s1] sm:$0xf]
      %vm442 = vcmask 31744
      %v444 = vsel %vm442, %v382, 0
      %v447 = vsel %vm442, %v383, 0
      %v450 = vsel %vm442, %v384, 0
      %v453 = vsel %vm442, %v385, 0
      %v456 = vsel %vm442, %v386, 0
      %v459 = vsel %vm442, %v387, 0
      %v462 = vsel %vm442, %v388, 0
      %v465 = vsel %vm442, %v389, 0
      %vm467 = vcmask 1043456
      %v469 = vsel %vm467, %v441, 0
      %471 = vmatprep.subr.mxu0 0.0
      %472 = vmatpush1.msra.mxu0 %v469
      %473 = vmatprep.subr.mxu0 0.0
      %474 = vmatpush1.msra.mxu0 0.0
      %475 = vmatprep.subr.mxu0 0.0
      %476 = vmatpush1.msra.mxu0 0.0
      %477 = vmatprep.subr.mxu0 0.0
      %478 = vmatpush1.msra.mxu0 0.0
      %479 = vmatprep.subr.mxu0 0.0
      %480 = vmatpush1.msra.mxu0 0.0
      %481 = vmatprep.subr.mxu0 0.0
      %482 = vmatpush1.msra.mxu0 0.0
      %483 = vmatprep.subr.mxu0 0.0
      %484 = vmatpush1.msra.mxu0 0.0
      %485 = vmatprep.subr.mxu0 0.0
      %486 = vmatpush1.msra.mxu0 0.0
      %487 = vmatprep.subr.mxu0 0.0
      %488 = vmatpush1.msra.mxu0 0.0
      %489 = vmatprep.subr.mxu0 0.0
      %490 = vmatpush1.msra.mxu0 0.0
      %491 = vmatprep.subr.mxu0 0.0
      %492 = vmatpush1.msra.mxu0 0.0
      %493 = vmatprep.subr.mxu0 0.0
      %494 = vmatpush1.msra.mxu0 0.0
      %495 = vmatprep.subr.mxu0 0.0
      %496 = vmatpush1.msra.mxu0 0.0
      %497 = vmatprep.subr.mxu0 0.0
      %498 = vmatpush1.msra.mxu0 0.0
      %499 = vmatprep.subr.mxu0 0.0
      %500 = vmatpush1.msra.mxu0 0.0
      %501 = vmatprep.subr.mxu0 0.0
      %502 = vmatpush1.msra.mxu0 0.0
      %503 = vmatprep.subr.mxu0 0.0
      %504 = vmatpush1.msra.mxu0 0.0
      %505 = vmatprep.subr.mxu0 0.0
      %506 = vmatpush1.msra.mxu0 0.0
      %507 = vmatprep.subr.mxu0 0.0
      %508 = vmatpush1.msra.mxu0 0.0
      %509 = vmatprep.subr.mxu0 0.0
      %510 = vmatpush1.msra.mxu0 0.0
      %511 = vmatprep.subr.mxu0 0.0
      %512 = vmatpush1.msra.mxu0 0.0
      %513 = vmatprep.subr.mxu0 0.0
      %514 = vmatpush1.msra.mxu0 0.0
      %515 = vmatprep.subr.mxu0 0.0
      %516 = vmatpush1.msra.mxu0 0.0
      %517 = vmatprep.subr.mxu0 0.0
      %518 = vmatpush1.msra.mxu0 0.0
      %519 = vmatprep.subr.mxu0 0.0
      %520 = vmatpush1.msra.mxu0 0.0
      %521 = vmatprep.subr.mxu0 0.0
      %522 = vmatpush1.msra.mxu0 0.0
      %523 = vmatprep.subr.mxu0 0.0
      %524 = vmatpush1.msra.mxu0 0.0
      %525 = vmatprep.subr.mxu0 0.0
      %526 = vmatpush1.msra.mxu0 0.0
      %527 = vmatprep.subr.mxu0 0.0
      %528 = vmatpush1.msra.mxu0 0.0
      %529 = vmatprep.subr.mxu0 0.0
      %530 = vmatpush1.msra.mxu0 0.0
      %531 = vmatprep.subr.mxu0 0.0
      %532 = vmatpush1.msra.mxu0 0.0
      %533 = vmatprep.subr.mxu0 0.0
      %534 = vmatpush1.msra.mxu0 0.0
      %535 = vmatprep.mubr.f32.mxu0 0.0
      %536 = vmatmul.mubr.f32.gmra.mrb[0].mxu0 %v444
      %v537 = vpop.f32.mrb[0].mxu0
      %v538 = vadd.f32 0.0, %v537
      %v539 = vpop.f32.mrb[0].mxu0
      %540 = vmatprep.mubr.f32.mxu0 0.0
      %541 = vmatmul.mubr.f32.gmra.mrb[0].mxu0 %v447
      %v542 = vpop.f32.mrb[0].mxu0
      %v543 = vadd.f32 0.0, %v542
      %v544 = vpop.f32.mrb[0].mxu0
      %545 = vmatprep.mubr.f32.mxu0 0.0
      %546 = vmatmul.mubr.f32.gmra.mrb[0].mxu0 %v450
      %v547 = vpop.f32.mrb[0].mxu0
      %v548 = vadd.f32 0.0, %v547
      %v549 = vpop.f32.mrb[0].mxu0
      %550 = vmatprep.mubr.f32.mxu0 0.0
      %551 = vmatmul.mubr.f32.gmra.mrb[0].mxu0 %v453
      %v552 = vpop.f32.mrb[0].mxu0
      %v553 = vadd.f32 0.0, %v552
      %v554 = vpop.f32.mrb[0].mxu0
      %555 = vmatprep.mubr.f32.mxu0 0.0
      %556 = vmatmul.mubr.f32.gmra.mrb[0].mxu0 %v456
      %v557 = vpop.f32.mrb[0].mxu0
      %v558 = vadd.f32 0.0, %v557
      %v559 = vpop.f32.mrb[0].mxu0
      %560 = vmatprep.mubr.f32.mxu0 0.0
      %561 = vmatmul.mubr.f32.gmra.mrb[0].mxu0 %v459
      %v562 = vpop.f32.mrb[0].mxu0
      %v563 = vadd.f32 0.0, %v562
      %v564 = vpop.f32.mrb[0].mxu0
      %565 = vmatprep.mubr.f32.mxu0 0.0
      %566 = vmatmul.mubr.f32.gmra.mrb[0].mxu0 %v462
      %v567 = vpop.f32.mrb[0].mxu0
      %v568 = vadd.f32 0.0, %v567
      %v569 = vpop.f32.mrb[0].mxu0
      %570 = vmatprep.mubr.f32.mxu0 0.0
      %571 = vmatmul.mubr.f32.gmra.mrb[0].mxu0 %v465
      %v572 = vpop.f32.mrb[0].mxu0
      %v573 = vadd.f32 0.0, %v572
      %v574 = vpop.f32.mrb[0].mxu0
      %575 = vdwg.mxu0
      %v577 = vsel %vm442, %v228, 0
      %v580 = vsel %vm442, %v229, 0
      %v583 = vsel %vm442, %v230, 0
      %v586 = vsel %vm442, %v231, 0
      %v589 = vsel %vm442, %v232, 0
      %v592 = vsel %vm442, %v233, 0
      %v595 = vsel %vm442, %v234, 0
      %v598 = vsel %vm442, %v235, 0
      %v601 = vsel %vm467, %v440, 0
      %603 = vmatprep.subr.mxu0 0.0
      %604 = vmatpush1.msra.mxu0 %v601
      %605 = vmatprep.subr.mxu0 0.0
      %606 = vmatpush1.msra.mxu0 0.0
      %607 = vmatprep.subr.mxu0 0.0
      %608 = vmatpush1.msra.mxu0 0.0
      %609 = vmatprep.subr.mxu0 0.0
      %610 = vmatpush1.msra.mxu0 0.0
      %611 = vmatprep.subr.mxu0 0.0
      %612 = vmatpush1.msra.mxu0 0.0
      %613 = vmatprep.subr.mxu0 0.0
      %614 = vmatpush1.msra.mxu0 0.0
      %615 = vmatprep.subr.mxu0 0.0
      %616 = vmatpush1.msra.mxu0 0.0
      %617 = vmatprep.subr.mxu0 0.0
      %618 = vmatpush1.msra.mxu0 0.0
      %619 = vmatprep.subr.mxu0 0.0
      %620 = vmatpush1.msra.mxu0 0.0
      %621 = vmatprep.subr.mxu0 0.0
      %622 = vmatpush1.msra.mxu0 0.0
      %623 = vmatprep.subr.mxu0 0.0
      %624 = vmatpush1.msra.mxu0 0.0
      %625 = vmatprep.subr.mxu0 0.0
      %626 = vmatpush1.msra.mxu0 0.0
      %627 = vmatprep.subr.mxu0 0.0
      %628 = vmatpush1.msra.mxu0 0.0
      %629 = vmatprep.subr.mxu0 0.0
      %630 = vmatpush1.msra.mxu0 0.0
      %631 = vmatprep.subr.mxu0 0.0
      %632 = vmatpush1.msra.mxu0 0.0
      %633 = vmatprep.subr.mxu0 0.0
      %634 = vmatpush1.msra.mxu0 0.0
      %635 = vmatprep.subr.mxu0 0.0
      %636 = vmatpush1.msra.mxu0 0.0
      %637 = vmatprep.subr.mxu0 0.0
      %638 = vmatpush1.msra.mxu0 0.0
      %639 = vmatprep.subr.mxu0 0.0
      %640 = vmatpush1.msra.mxu0 0.0
      %641 = vmatprep.subr.mxu0 0.0
      %642 = vmatpush1.msra.mxu0 0.0
      %643 = vmatprep.subr.mxu0 0.0
      %644 = vmatpush1.msra.mxu0 0.0
      %645 = vmatprep.subr.mxu0 0.0
      %646 = vmatpush1.msra.mxu0 0.0
      %647 = vmatprep.subr.mxu0 0.0
      %648 = vmatpush1.msra.mxu0 0.0
      %649 = vmatprep.subr.mxu0 0.0
      %650 = vmatpush1.msra.mxu0 0.0
      %651 = vmatprep.subr.mxu0 0.0
      %652 = vmatpush1.msra.mxu0 0.0
      %653 = vmatprep.subr.mxu0 0.0
      %654 = vmatpush1.msra.mxu0 0.0
      %655 = vmatprep.subr.mxu0 0.0
      %656 = vmatpush1.msra.mxu0 0.0
      %657 = vmatprep.subr.mxu0 0.0
      %658 = vmatpush1.msra.mxu0 0.0
      %659 = vmatprep.subr.mxu0 0.0
      %660 = vmatpush1.msra.mxu0 0.0
      %661 = vmatprep.subr.mxu0 0.0
      %662 = vmatpush1.msra.mxu0 0.0
      %663 = vmatprep.subr.mxu0 0.0
      %664 = vmatpush1.msra.mxu0 0.0
      %665 = vmatprep.subr.mxu0 0.0
      %666 = vmatpush1.msra.mxu0 0.0
      %667 = vmatprep.mubr.f32.mxu0 0.0
      %668 = vmatmul.mubr.f32.gmra.mrb[0].mxu0 %v577
      %v669 = vpop.f32.mrb[0].mxu0
      %v670 = vadd.f32 %v538, %v669
      %v671 = vpop.f32.mrb[0].mxu0
      %672 = vmatprep.mubr.f32.mxu0 0.0
      %673 = vmatmul.mubr.f32.gmra.mrb[0].mxu0 %v580
      %v674 = vpop.f32.mrb[0].mxu0
      %v675 = vadd.f32 %v543, %v674
      %v676 = vpop.f32.mrb[0].mxu0
      %677 = vmatprep.mubr.f32.mxu0 0.0
      %678 = vmatmul.mubr.f32.gmra.mrb[0].mxu0 %v583
      %v679 = vpop.f32.mrb[0].mxu0
      %v680 = vadd.f32 %v548, %v679
      %v681 = vpop.f32.mrb[0].mxu0
      %682 = vmatprep.mubr.f32.mxu0 0.0
      %683 = vmatmul.mubr.f32.gmra.mrb[0].mxu0 %v586
      %v684 = vpop.f32.mrb[0].mxu0
      %v685 = vadd.f32 %v553, %v684
      %v686 = vpop.f32.mrb[0].mxu0
      %687 = vmatprep.mubr.f32.mxu0 0.0
      %688 = vmatmul.mubr.f32.gmra.mrb[0].mxu0 %v589
      %v689 = vpop.f32.mrb[0].mxu0
      %v690 = vadd.f32 %v558, %v689
      %v691 = vpop.f32.mrb[0].mxu0
      %692 = vmatprep.mubr.f32.mxu0 0.0
      %693 = vmatmul.mubr.f32.gmra.mrb[0].mxu0 %v592
      %v694 = vpop.f32.mrb[0].mxu0
      %v695 = vadd.f32 %v563, %v694
      %v696 = vpop.f32.mrb[0].mxu0
      %697 = vmatprep.mubr.f32.mxu0 0.0
      %698 = vmatmul.mubr.f32.gmra.mrb[0].mxu0 %v595
      %v699 = vpop.f32.mrb[0].mxu0
      %v700 = vadd.f32 %v568, %v699
      %v701 = vpop.f32.mrb[0].mxu0
      %702 = vmatprep.mubr.f32.mxu0 0.0
      %703 = vmatmul.mubr.f32.gmra.mrb[0].mxu0 %v598
      %v704 = vpop.f32.mrb[0].mxu0
      %v705 = vadd.f32 %v573, %v704
      %v706 = vpop.f32.mrb[0].mxu0
      %707 = vdwg.mxu0
      %s708 = scalar_lea.vmem %s1, 8
      %v709 = vld [vmem:[%s708] sm:$0xf]
      %v711 = vsel %vm442, %v431, 0
      %v714 = vsel %vm442, %v432, 0
      %v717 = vsel %vm442, %v433, 0
      %v720 = vsel %vm442, %v434, 0
      %v723 = vsel %vm442, %v435, 0
      %v726 = vsel %vm442, %v436, 0
      %v729 = vsel %vm442, %v437, 0
      %v732 = vsel %vm442, %v438, 0
      %v735 = vsel %vm467, %v709, 0
      %737 = vmatprep.subr.mxu0 0.0
      %738 = vmatpush1.msra.mxu0 %v735
      %739 = vmatprep.subr.mxu0 0.0
      %740 = vmatpush1.msra.mxu0 0.0
      %741 = vmatprep.subr.mxu0 0.0
      %742 = vmatpush1.msra.mxu0 0.0
      %743 = vmatprep.subr.mxu0 0.0
      %744 = vmatpush1.msra.mxu0 0.0
      %745 = vmatprep.subr.mxu0 0.0
      %746 = vmatpush1.msra.mxu0 0.0
      %747 = vmatprep.subr.mxu0 0.0
      %748 = vmatpush1.msra.mxu0 0.0
      %749 = vmatprep.subr.mxu0 0.0
      %750 = vmatpush1.msra.mxu0 0.0
      %751 = vmatprep.subr.mxu0 0.0
      %752 = vmatpush1.msra.mxu0 0.0
      %753 = vmatprep.subr.mxu0 0.0
      %754 = vmatpush1.msra.mxu0 0.0
      %755 = vmatprep.subr.mxu0 0.0
      %756 = vmatpush1.msra.mxu0 0.0
      %757 = vmatprep.subr.mxu0 0.0
      %758 = vmatpush1.msra.mxu0 0.0
      %759 = vmatprep.subr.mxu0 0.0
      %760 = vmatpush1.msra.mxu0 0.0
      %761 = vmatprep.subr.mxu0 0.0
      %762 = vmatpush1.msra.mxu0 0.0
      %763 = vmatprep.subr.mxu0 0.0
      %764 = vmatpush1.msra.mxu0 0.0
      %765 = vmatprep.subr.mxu0 0.0
      %766 = vmatpush1.msra.mxu0 0.0
      %767 = vmatprep.subr.mxu0 0.0
      %768 = vmatpush1.msra.mxu0 0.0
      %769 = vmatprep.subr.mxu0 0.0
      %770 = vmatpush1.msra.mxu0 0.0
      %771 = vmatprep.subr.mxu0 0.0
      %772 = vmatpush1.msra.mxu0 0.0
      %773 = vmatprep.subr.mxu0 0.0
      %774 = vmatpush1.msra.mxu0 0.0
      %775 = vmatprep.subr.mxu0 0.0
      %776 = vmatpush1.msra.mxu0 0.0
      %777 = vmatprep.subr.mxu0 0.0
      %778 = vmatpush1.msra.mxu0 0.0
      %779 = vmatprep.subr.mxu0 0.0
      %780 = vmatpush1.msra.mxu0 0.0
      %781 = vmatprep.subr.mxu0 0.0
      %782 = vmatpush1.msra.mxu0 0.0
      %783 = vmatprep.subr.mxu0 0.0
      %784 = vmatpush1.msra.mxu0 0.0
      %785 = vmatprep.subr.mxu0 0.0
      %786 = vmatpush1.msra.mxu0 0.0
      %787 = vmatprep.subr.mxu0 0.0
      %788 = vmatpush1.msra.mxu0 0.0
      %789 = vmatprep.subr.mxu0 0.0
      %790 = vmatpush1.msra.mxu0 0.0
      %791 = vmatprep.subr.mxu0 0.0
      %792 = vmatpush1.msra.mxu0 0.0
      %793 = vmatprep.subr.mxu0 0.0
      %794 = vmatpush1.msra.mxu0 0.0
      %795 = vmatprep.subr.mxu0 0.0
      %796 = vmatpush1.msra.mxu0 0.0
      %797 = vmatprep.subr.mxu0 0.0
      %798 = vmatpush1.msra.mxu0 0.0
      %799 = vmatprep.subr.mxu0 0.0
      %800 = vmatpush1.msra.mxu0 0.0
      %801 = vmatprep.mubr.f32.mxu0 0.0
      %802 = vmatmul.mubr.f32.gmra.mrb[0].mxu0 %v711
      %v803 = vpop.f32.mrb[0].mxu0
      %v804 = vadd.f32 0.0, %v803
      %v805 = vpop.f32.mrb[0].mxu0
      %806 = vmatprep.mubr.f32.mxu0 0.0
      %807 = vmatmul.mubr.f32.gmra.mrb[0].mxu0 %v714
      %v808 = vpop.f32.mrb[0].mxu0
      %v809 = vadd.f32 0.0, %v808
      %v810 = vpop.f32.mrb[0].mxu0
      %811 = vmatprep.mubr.f32.mxu0 0.0
      %812 = vmatmul.mubr.f32.gmra.mrb[0].mxu0 %v717
      %v813 = vpop.f32.mrb[0].mxu0
      %v814 = vadd.f32 0.0, %v813
      %v815 = vpop.f32.mrb[0].mxu0
      %816 = vmatprep.mubr.f32.mxu0 0.0
      %817 = vmatmul.mubr.f32.gmra.mrb[0].mxu0 %v720
      %v818 = vpop.f32.mrb[0].mxu0
      %v819 = vadd.f32 0.0, %v818
      %v820 = vpop.f32.mrb[0].mxu0
      %821 = vmatprep.mubr.f32.mxu0 0.0
      %822 = vmatmul.mubr.f32.gmra.mrb[0].mxu0 %v723
      %v823 = vpop.f32.mrb[0].mxu0
      %v824 = vadd.f32 0.0, %v823
      %v825 = vpop.f32.mrb[0].mxu0
      %826 = vmatprep.mubr.f32.mxu0 0.0
      %827 = vmatmul.mubr.f32.gmra.mrb[0].mxu0 %v726
      %v828 = vpop.f32.mrb[0].mxu0
      %v829 = vadd.f32 0.0, %v828
      %v830 = vpop.f32.mrb[0].mxu0
      %831 = vmatprep.mubr.f32.mxu0 0.0
      %832 = vmatmul.mubr.f32.gmra.mrb[0].mxu0 %v729
      %v833 = vpop.f32.mrb[0].mxu0
      %v834 = vadd.f32 0.0, %v833
      %v835 = vpop.f32.mrb[0].mxu0
      %836 = vmatprep.mubr.f32.mxu0 0.0
      %837 = vmatmul.mubr.f32.gmra.mrb[0].mxu0 %v732
      %v838 = vpop.f32.mrb[0].mxu0
      %v839 = vadd.f32 0.0, %v838
      %v840 = vpop.f32.mrb[0].mxu0
      %841 = vdwg.mxu0
      %v842 = vadd.f32 %v670, %v804
      %v843 = vadd.f32 %v675, %v809
      %v844 = vadd.f32 %v680, %v814
      %v845 = vadd.f32 %v685, %v819
      %v846 = vadd.f32 %v690, %v824
      %v847 = vadd.f32 %v695, %v829
      %v848 = vadd.f32 %v700, %v834
      %v849 = vadd.f32 %v705, %v839
      %v850 = vld [vmem:[%s2] sm:$0x1]
      %v852 = vlaneseq
      %v853 = vshrl.u32 %v852, 7
      %v854 = vsub.s32 0, %v853
      %v855 = vrot.slane %v850, %v854
      %v857 = vadd.f32 %v842, %v855
      %v858 = vadd.f32 %v843, %v855
      %v859 = vadd.f32 %v844, %v855
      %v860 = vadd.f32 %v845, %v855
      %v861 = vadd.f32 %v846, %v855
      %v862 = vadd.f32 %v847, %v855
      %v863 = vadd.f32 %v848, %v855
      %v864 = vadd.f32 %v849, %v855
      %v865 = vxor.u32 %v857, 2147483648
      %v866 = vxor.u32 %v858, 2147483648
      %v867 = vxor.u32 %v859, 2147483648
      %v868 = vxor.u32 %v860, 2147483648
      %v869 = vxor.u32 %v861, 2147483648
      %v870 = vxor.u32 %v862, 2147483648
      %v871 = vxor.u32 %v863, 2147483648
      %v872 = vxor.u32 %v864, 2147483648
      %v873 = vmul.f32 %v865, 1.442695
      %v874 = vpow.pop %v873
      %v875 = vmul.f32 %v866, 1.442695
      %v876 = vpow.pop %v875
      %v877 = vmul.f32 %v867, 1.442695
      %v878 = vpow.pop %v877
      %v879 = vmul.f32 %v868, 1.442695
      %v880 = vpow.pop %v879
      %v881 = vmul.f32 %v869, 1.442695
      %v882 = vpow.pop %v881
      %v883 = vmul.f32 %v870, 1.442695
      %v884 = vpow.pop %v883
      %v885 = vmul.f32 %v871, 1.442695
      %v886 = vpow.pop %v885
      %v887 = vmul.f32 %v872, 1.442695
      %v888 = vpow.pop %v887
      %v889 = vadd.f32 %v874, 1.0
      %v890 = vadd.f32 %v876, 1.0
      %v891 = vadd.f32 %v878, 1.0
      %v892 = vadd.f32 %v880, 1.0
      %v893 = vadd.f32 %v882, 1.0
      %v894 = vadd.f32 %v884, 1.0
      %v895 = vadd.f32 %v886, 1.0
      %v896 = vadd.f32 %v888, 1.0
      %v897 = vrcp.pop %v889
      %v898 = vmul.f32 1.0, %v897
      %v899 = vrcp.pop %v890
      %v900 = vmul.f32 1.0, %v899
      %v901 = vrcp.pop %v891
      %v902 = vmul.f32 1.0, %v901
      %v903 = vrcp.pop %v892
      %v904 = vmul.f32 1.0, %v903
      %v905 = vrcp.pop %v893
      %v906 = vmul.f32 1.0, %v905
      %v907 = vrcp.pop %v894
      %v908 = vmul.f32 1.0, %v907
      %v909 = vrcp.pop %v895
      %v910 = vmul.f32 1.0, %v909
      %v911 = vrcp.pop %v896
      %v912 = vmul.f32 1.0, %v911
      %v913 = vmul.f32 %v857, %v898
      %v914 = vmul.f32 %v858, %v900
      %v915 = vmul.f32 %v859, %v902
      %v916 = vmul.f32 %v860, %v904
      %v917 = vmul.f32 %v861, %v906
      %v918 = vmul.f32 %v862, %v908
      %v919 = vmul.f32 %v863, %v910
      %v920 = vmul.f32 %v864, %v912
      %v921 = vld [vmem:[%s3] sm:$0xff]
      %v922 = vld [vmem:[%s3 + $0x8] sm:$0xff]
      %v923 = vld [vmem:[%s4] sm:$0x1]
      %v925 = vlaneseq
      %v926 = vshrl.u32 %v925, 7
      %v927 = vsub.s32 0, %v926
      %v928 = vrot.slane %v923, %v927
      %vm930 = vcmask 130048
      %v932 = vsel %vm930, %v913, 0
      %v935 = vsel %vm930, %v914, 0
      %v938 = vsel %vm930, %v915, 0
      %v941 = vsel %vm930, %v916, 0
      %v944 = vsel %vm930, %v917, 0
      %v947 = vsel %vm930, %v918, 0
      %v950 = vsel %vm930, %v919, 0
      %v953 = vsel %vm930, %v920, 0
      %955 = vmatprep.subr.mxu0 0.0
      %956 = vmatpush1.msra.mxu0 %v921
      %957 = vmatprep.subr.mxu0 0.0
      %958 = vmatpush1.msra.mxu0 %v922
      %959 = vmatprep.subr.mxu0 0.0
      %960 = vmatpush1.msra.mxu0 0.0
      %961 = vmatprep.subr.mxu0 0.0
      %962 = vmatpush1.msra.mxu0 0.0
      %963 = vmatprep.subr.mxu0 0.0
      %964 = vmatpush1.msra.mxu0 0.0
      %965 = vmatprep.subr.mxu0 0.0
      %966 = vmatpush1.msra.mxu0 0.0
      %967 = vmatprep.subr.mxu0 0.0
      %968 = vmatpush1.msra.mxu0 0.0
      %969 = vmatprep.subr.mxu0 0.0
      %970 = vmatpush1.msra.mxu0 0.0
      %971 = vmatprep.subr.mxu0 0.0
      %972 = vmatpush1.msra.mxu0 0.0
      %973 = vmatprep.subr.mxu0 0.0
      %974 = vmatpush1.msra.mxu0 0.0
      %975 = vmatprep.subr.mxu0 0.0
      %976 = vmatpush1.msra.mxu0 0.0
      %977 = vmatprep.subr.mxu0 0.0
      %978 = vmatpush1.msra.mxu0 0.0
      %979 = vmatprep.subr.mxu0 0.0
      %980 = vmatpush1.msra.mxu0 0.0
      %981 = vmatprep.subr.mxu0 0.0
      %982 = vmatpush1.msra.mxu0 0.0
      %983 = vmatprep.subr.mxu0 0.0
      %984 = vmatpush1.msra.mxu0 0.0
      %985 = vmatprep.subr.mxu0 0.0
      %986 = vmatpush1.msra.mxu0 0.0
      %987 = vmatprep.subr.mxu0 0.0
      %988 = vmatpush1.msra.mxu0 0.0
      %989 = vmatprep.subr.mxu0 0.0
      %990 = vmatpush1.msra.mxu0 0.0
      %991 = vmatprep.subr.mxu0 0.0
      %992 = vmatpush1.msra.mxu0 0.0
      %993 = vmatprep.subr.mxu0 0.0
      %994 = vmatpush1.msra.mxu0 0.0
      %995 = vmatprep.subr.mxu0 0.0
      %996 = vmatpush1.msra.mxu0 0.0
      %997 = vmatprep.subr.mxu0 0.0
      %998 = vmatpush1.msra.mxu0 0.0
      %999 = vmatprep.subr.mxu0 0.0
      %1000 = vmatpush1.msra.mxu0 0.0
      %1001 = vmatprep.subr.mxu0 0.0
      %1002 = vmatpush1.msra.mxu0 0.0
      %1003 = vmatprep.subr.mxu0 0.0
      %1004 = vmatpush1.msra.mxu0 0.0
      %1005 = vmatprep.subr.mxu0 0.0
      %1006 = vmatpush1.msra.mxu0 0.0
      %1007 = vmatprep.subr.mxu0 0.0
      %1008 = vmatpush1.msra.mxu0 0.0
      %1009 = vmatprep.subr.mxu0 0.0
      %1010 = vmatpush1.msra.mxu0 0.0
      %1011 = vmatprep.subr.mxu0 0.0
      %1012 = vmatpush1.msra.mxu0 0.0
      %1013 = vmatprep.subr.mxu0 0.0
      %1014 = vmatpush1.msra.mxu0 0.0
      %1015 = vmatprep.subr.mxu0 0.0
      %1016 = vmatpush1.msra.mxu0 0.0
      %1017 = vmatprep.subr.mxu0 0.0
      %1018 = vmatpush1.msra.mxu0 0.0
      %1019 = vmatprep.mubr.f32.mxu0 0.0
      %1020 = vmatmul.mubr.f32.gmra.mrb[0].mxu0 %v932
      %v1021 = vpop.f32.mrb[0].mxu0
      %v1022 = vadd.f32 %v928, %v1021
      %v1023 = vpop.f32.mrb[0].mxu0
      %1024 = vmatprep.mubr.f32.mxu0 0.0
      %1025 = vmatmul.mubr.f32.gmra.mrb[0].mxu0 %v935
      %v1026 = vpop.f32.mrb[0].mxu0
      %v1027 = vadd.f32 %v928, %v1026
      %v1028 = vpop.f32.mrb[0].mxu0
      %1029 = vmatprep.mubr.f32.mxu0 0.0
      %1030 = vmatmul.mubr.f32.gmra.mrb[0].mxu0 %v938
      %v1031 = vpop.f32.mrb[0].mxu0
      %v1032 = vadd.f32 %v928, %v1031
      %v1033 = vpop.f32.mrb[0].mxu0
      %1034 = vmatprep.mubr.f32.mxu0 0.0
      %1035 = vmatmul.mubr.f32.gmra.mrb[0].mxu0 %v941
      %v1036 = vpop.f32.mrb[0].mxu0
      %v1037 = vadd.f32 %v928, %v1036
      %v1038 = vpop.f32.mrb[0].mxu0
      %1039 = vmatprep.mubr.f32.mxu0 0.0
      %1040 = vmatmul.mubr.f32.gmra.mrb[0].mxu0 %v944
      %v1041 = vpop.f32.mrb[0].mxu0
      %v1042 = vadd.f32 %v928, %v1041
      %v1043 = vpop.f32.mrb[0].mxu0
      %1044 = vmatprep.mubr.f32.mxu0 0.0
      %1045 = vmatmul.mubr.f32.gmra.mrb[0].mxu0 %v947
      %v1046 = vpop.f32.mrb[0].mxu0
      %v1047 = vadd.f32 %v928, %v1046
      %v1048 = vpop.f32.mrb[0].mxu0
      %1049 = vmatprep.mubr.f32.mxu0 0.0
      %1050 = vmatmul.mubr.f32.gmra.mrb[0].mxu0 %v950
      %v1051 = vpop.f32.mrb[0].mxu0
      %v1052 = vadd.f32 %v928, %v1051
      %v1053 = vpop.f32.mrb[0].mxu0
      %1054 = vmatprep.mubr.f32.mxu0 0.0
      %1055 = vmatmul.mubr.f32.gmra.mrb[0].mxu0 %v953
      %v1056 = vpop.f32.mrb[0].mxu0
      %v1057 = vadd.f32 %v928, %v1056
      %v1058 = vpop.f32.mrb[0].mxu0
      %1059 = vdwg.mxu0
      %v1060 = vadd.f32 %v228, %v1022
      %v1061 = vadd.f32 %v229, %v1027
      %v1062 = vadd.f32 %v230, %v1032
      %v1063 = vadd.f32 %v231, %v1037
      %v1064 = vadd.f32 %v232, %v1042
      %v1065 = vadd.f32 %v233, %v1047
      %v1066 = vadd.f32 %v234, %v1052
      %v1067 = vadd.f32 %v235, %v1057
      %1068 = vst.msk [vmem:[%s226] sm:$0xff] %vm442, %v1060
      %1069 = vst.msk [vmem:[%s226 + $0x8] sm:$0xff] %vm442, %v1061
      %1070 = vst.msk [vmem:[%s226 + $0x10] sm:$0xff] %vm442, %v1062
      %1071 = vst.msk [vmem:[%s226 + $0x18] sm:$0xff] %vm442, %v1063
      %1072 = vst.msk [vmem:[%s226 + $0x20] sm:$0xff] %vm442, %v1064
      %1073 = vst.msk [vmem:[%s226 + $0x28] sm:$0xff] %vm442, %v1065
      %1074 = vst.msk [vmem:[%s226 + $0x30] sm:$0xff] %vm442, %v1066
      %1075 = vst.msk [vmem:[%s226 + $0x38] sm:$0xff] %vm442, %v1067
      %s1076 = smul.u32 8, %s16
      %p1077 = scmp.lt.s32.totalorder %s1076, 31
      %s1078 = scalar_select %p1077, %s1076, 31
      %s1079 = smul.addr %s1078, 8
      %s1080 = scalar_lea.vmem %s5, %s1079
      // Predicated region
      $region41: #{tpu_custom_call.1} parent=39 // pred_check
        %p1081 = pneg %p144
      $region42: #{tpu_custom_call.1} parent=39 // pred_check_branch
        %1083 = sbr.rel (%p1081) target = $region44
      $region43: #{tpu_custom_call.1} parent=39 // pred_region
        %s1084 = smul.u32 8, %s16
      $region44: #{tpu_custom_call.1} parent=39 // pred_fallthru
        _
    $region40: #{tpu_custom_call.1} parent=5 // pred_fallthru
      _
    %p1085 = scmp.le.s32.totalorder 2, %s11
    // Predicated region
    $region45: #{tpu_custom_call.1} parent=5 // pred_check
      %p1086 = pneg %p1085
    $region46: #{tpu_custom_call.1} parent=5 // pred_check_branch
      %1088 = sbr.rel (%p1086) target = $region48
    $region47: #{tpu_custom_call.1} parent=5 // pred_region
      %s1089 = ssub.s32 %s11, 2
      // Predicated region
      $region49: #{tpu_custom_call.1} parent=47 // pred_check
        %p1090 = pneg %p150
      $region50: #{tpu_custom_call.1} parent=47 // pred_check_branch
        %1092 = sbr.rel (%p1090) target = $region52
      $region51: #{tpu_custom_call.1} parent=47 // pred_region
        %s1093 = smul.u32 8, %s17
        %p1094 = scmp.lt.s32.totalorder %s1093, 31
        %s1095 = scalar_select %p1094, %s1093, 31
        %s1096 = smul.addr %s1095, 8
        %s1097 = scalar_lea.vmem %s5, %s1096
      $region52: #{tpu_custom_call.1} parent=47 // pred_fallthru
        _
    $region48: #{tpu_custom_call.1} parent=5 // pred_fallthru
      _
  $region6: #{tpu_custom_call.1} parent=0 // loop_footer
    %s15 = sadd.s32 1, %s11
  $region7: #{tpu_custom_call.1} parent=0 // loop_footer_branch
    %10 = sbr.rel target = $region3
  $region8: #{tpu_custom_call.1} parent=0 // loop_exit
    _

</llo_original>
